<compile_context>
chip_gen: v6e
topology: v6e:2x2x1
jax: 0.10.0
libtpu: 0.0.40
codegen_flags: <defaults>
</compile_context>

<pallas_src>
import functools
from collections import namedtuple

import numpy as np
import jax
import jax.numpy as jnp
from jax.experimental import pallas as pl
from jax.experimental.pallas import tpu as pltpu

Sample = namedtuple("Sample", "trajectories values chains")


# ----------------------------------------------------------------------------
# diffusion schedule (numpy, deterministic)
# ----------------------------------------------------------------------------
def cosine_beta_schedule(timesteps, s=0.008, dtype=np.float32):
    steps = timesteps + 1
    x = np.linspace(0, steps, steps, dtype=np.float64)
    alphas_cumprod = np.cos(((x / steps) + s) / (1 + s) * np.pi * 0.5) ** 2
    alphas_cumprod = alphas_cumprod / alphas_cumprod[0]
    betas = 1.0 - (alphas_cumprod[1:] / alphas_cumprod[:-1])
    return np.clip(betas, 0.0, 0.999).astype(dtype)


# ----------------------------------------------------------------------------
# Fused Pallas kernel: the whole reverse-diffusion loop in one invocation.
#
# Per (statically unrolled) timestep t = nt-1 ... 0:
#   h        = x @ w1 + temb[t]                        (layer-1, shared)
#   h_mix    = (1-w)*relu(h) + w*relu(h + cond_emb)    (CFG folded pre-matmul)
#   eps      = h_mix @ w2 + b2                         (layer-2, single matmul)
#   x        = a[t]*x - b[t]*eps + std[t]*noise[t]     (pre-folded posterior)
#   x        = where(pin, cond_pin, x)                 (apply_conditioning)
# ----------------------------------------------------------------------------
def _fused_p_sample_loop_kernel(
        x0_ref,          # (B, d_in)       initial Gaussian trajectory draw
        noise_ref,       # (nt, B, d_in)   all per-step noise, resident in VMEM
        w1_ref,          # (d_in, hidden)
        temb_ref,        # (nt, hidden)    time embedding (b1 == 0 folded in)
        wcf_ref,         # (d_in, hidden)  cond embedding weight, zero-expanded
        w2_ref,          # (hidden, d_in)
        b2_ref,          # (1, d_in)
        cond_pin_ref,    # (B, d_in)       apply_conditioning values
        pin_mask_ref,    # (1, d_in)       1.0 where the trajectory is pinned
        x_out_ref,       # OUT (B, d_in)
        *, coef_a, coef_b, coef_std, guidance_w, n_timesteps):
    # ---- loop-invariants: load once, hoisted out of the unrolled loop -------
    w1 = w1_ref[...]
    w2 = w2_ref[...]
    b2 = b2_ref[...]
    cond_pin = cond_pin_ref[...]
    pin = pin_mask_ref[...] > 0.5                        # (1, d_in) bool mask
    # cond embedding == cond @ wc, via zero-expanded weight on cond_pin
    cond_emb = jnp.dot(cond_pin, wcf_ref[...],
                       preferred_element_type=jnp.float32)   # (B, hidden)

    w_u = 1.0 - guidance_w
    w_c = guidance_w

    # ---- initial apply_conditioning (as in p_sample_loop before the loop) ---
    x = jnp.where(pin, cond_pin, x0_ref[...])

    # ---- statically-unrolled reverse-diffusion loop --------------------------
    for s in range(n_timesteps):
        t = n_timesteps - 1 - s

        # epsilon model, layer 1 (shared between CFG branches)
        h = jnp.dot(x, w1, preferred_element_type=jnp.float32)
        h = h + temb_ref[t:t + 1, :]                     # static row slice
        h_u = jnp.maximum(h, 0.0)                        # force_dropout=True
        h_c = jnp.maximum(h + cond_emb, 0.0)             # use_dropout=False

        # CFG combine folded before layer 2 (exact, since dot+bias is affine)
        h_mix = w_u * h_u + w_c * h_c
        eps = jnp.dot(h_mix, w2, preferred_element_type=jnp.float32) + b2

        # predict_start_from_noise + q_posterior mean, pre-folded:
        #   a = c1*sr + c2,  b = c1*srm1,  std = exp(0.5*logvar) (std[0] = 0)
        x = (coef_a[t] * x - coef_b[t] * eps
             + coef_std[t] * noise_ref[t, :, :])

        # apply_conditioning
        x = jnp.where(pin, cond_pin, x)

    x_out_ref[...] = x


# ----------------------------------------------------------------------------
# GaussianDiffusion (sampling / forward path)
# ----------------------------------------------------------------------------
class GaussianDiffusionPallas:
    def __init__(self, horizon, observation_dim, action_dim, *, hidden=128,
                 n_timesteps=8, clip_denoised=False, predict_epsilon=True,
                 returns_condition=True, condition_guidance_w=1.2, key=None):
        assert predict_epsilon and returns_condition and not clip_denoised
        assert hidden % 2 == 0
        self.horizon = int(horizon)
        self.observation_dim = int(observation_dim)
        self.action_dim = int(action_dim)
        self.transition_dim = self.observation_dim + self.action_dim
        self.hidden = int(hidden)
        self.n_timesteps = int(n_timesteps)
        self.condition_guidance_w = float(condition_guidance_w)
        self.d_in = self.horizon * self.transition_dim

        # --- diffusion schedule buffers (same math as the torch module) ------
        betas = cosine_beta_schedule(self.n_timesteps).astype(np.float64)
        alphas = 1.0 - betas
        ac = np.cumprod(alphas, axis=0)
        ac_prev = np.concatenate([[1.0], ac[:-1]])

        sr = np.sqrt(1.0 / ac)                       # sqrt_recip_alphas_cumprod
        srm1 = np.sqrt(1.0 / ac - 1.0)               # sqrt_recipm1_alphas_cumprod
        posterior_variance = betas * (1.0 - ac_prev) / (1.0 - ac)
        log_var = np.log(np.clip(posterior_variance, 1e-20, None))
        c1 = betas * np.sqrt(ac_prev) / (1.0 - ac)   # posterior_mean_coef1
        c2 = (1.0 - ac_prev) * np.sqrt(alphas) / (1.0 - ac)  # coef2
        std = np.exp(0.5 * log_var)
        std[0] = 0.0                                 # default_sample_fn: noise[t==0]=0

        # pre-folded per-step constants, baked into the unrolled kernel loop
        a_coef = c1 * sr + c2
        b_coef = c1 * srm1
        self._coef_a = tuple(float(v) for v in a_coef)
        self._coef_b = tuple(float(v) for v in b_coef)
        self._coef_std = tuple(float(v) for v in std)

        # --- synthetic epsilon-model weights ----------------------------------
        if key is None:
            key = jax.random.PRNGKey(0)
        k1, k2, k3 = jax.random.split(key, 3)
        f32 = jnp.float32
        self.w1 = (jax.random.normal(k1, (self.d_in, self.hidden), f32)
                   / np.sqrt(self.d_in))
        self.w2 = (jax.random.normal(k2, (self.hidden, self.d_in), f32)
                   / np.sqrt(self.hidden))
        wc = (jax.random.normal(k3, (self.observation_dim, self.hidden), f32)
              / np.sqrt(self.observation_dim))
        # zero-expanded cond-embedding weight: cond_pin @ wc_full == cond @ wc
        self.wc_full = (jnp.zeros((self.d_in, self.hidden), f32)
                        .at[self.action_dim:self.transition_dim, :].set(wc))
        self.b2 = jnp.zeros((1, self.d_in), f32)

        # sinusoidal time-embedding table (layer-1 bias b1 == 0 folded in)
        half = self.hidden // 2
        freqs = np.exp(-np.log(10000.0) * np.arange(half) / half)
        tt = np.arange(self.n_timesteps)[:, None] * freqs[None, :]
        self.temb = jnp.asarray(
            np.concatenate([np.sin(tt), np.cos(tt)], axis=-1), f32)

        # apply_conditioning pin mask in the flattened (B, H*T) layout.
        # TODO(synk): original diffuser `apply_conditioning` source not
        # provided; standard semantics — pin timestep-0 observation dims.
        pin = np.zeros((1, self.d_in), np.float32)
        pin[0, self.action_dim:self.transition_dim] = 1.0
        self.pin_mask = jnp.asarray(pin)

        self._sample = jax.jit(self._sample_impl)

    # ---- entire p_sample_loop under one jit / one pallas_call ---------------
    def _sample_impl(self, cond, key):
        b = cond.shape[0]
        d_in, nt = self.d_in, self.n_timesteps
        k_init, k_noise = jax.random.split(key)

        # initial trajectory draw + all per-step noise (deterministic stream)
        x0 = jax.random.normal(k_init, (b, d_in), jnp.float32)
        noise_all = jax.random.normal(k_noise, (nt, b, d_in), jnp.float32)

        # apply_conditioning values in the flattened layout
        cond_pin = jnp.zeros((b, d_in), jnp.float32).at[
            :, self.action_dim:self.transition_dim].set(cond)

        kernel = functools.partial(
            _fused_p_sample_loop_kernel,
            coef_a=self._coef_a, coef_b=self._coef_b, coef_std=self._coef_std,
            guidance_w=self.condition_guidance_w, n_timesteps=nt)

        vmem = pl.BlockSpec(memory_space=pltpu.MemorySpace.VMEM)
        x_final = pl.pallas_call(
            kernel,
            out_shape=jax.ShapeDtypeStruct((b, d_in), jnp.float32),
            in_specs=[vmem] * 9,
            out_specs=vmem,
        )(x0, noise_all, self.w1, self.temb, self.wc_full,
          self.w2, self.b2, cond_pin, self.pin_mask)

        x = x_final.reshape(b, self.horizon, self.transition_dim)
        # default_sample_fn values are all zero -> sort_by_values is identity;
        # the argsort/gather was dead work and has been removed.
        values = jnp.zeros((b,), jnp.float32)
        return Sample(x, values, None)

    # ---- public API mirroring the torch module -------------------------------
    def p_sample_loop(self, shape, cond, key):
        assert shape == (cond.shape[0], self.horizon, self.transition_dim)
        return self._sample(cond, key)

    def conditional_sample(self, cond, key, horizon=None):
        horizon = horizon or self.horizon
        shape = (cond.shape[0], horizon, self.transition_dim)
        return self.p_sample_loop(shape, cond, key)

    def forward(self, cond, key):
        return self.conditional_sample(cond, key)


# ----------------------------------------------------------------------------
if __name__ == "__main__":
    key = jax.random.PRNGKey(0)
    k_model, k_cond, k_sample = jax.random.split(key, 3)

    batch = 2
    horizon = 16                 # horizon * transition_dim = 128 -> lane-dense
    observation_dim = 6
    action_dim = 2
    transition_dim = observation_dim + action_dim
    n_timesteps = 8
    hidden = 128

    diffusion = GaussianDiffusionPallas(
        horizon, observation_dim, action_dim, hidden=hidden,
        n_timesteps=n_timesteps, condition_guidance_w=1.2, key=k_model)

    cond = jax.random.normal(k_cond, (batch, observation_dim), jnp.float32)
    sample = diffusion.forward(cond, k_sample)

    traj = jax.block_until_ready(sample.trajectories)
    vals = jax.block_until_ready(sample.values)
    assert traj.shape == (batch, horizon, transition_dim)
    assert vals.shape == (batch,)
    assert bool(jnp.all(jnp.isfinite(traj)))
    # apply_conditioning pin must survive the full reverse loop
    assert bool(jnp.allclose(traj[:, 0, action_dim:], cond, atol=1e-5))
    print("KERNEL_OK")
</pallas_src>

<mosaic_0001>
module attributes {stable_mosaic.version = 11 : i64} {
  func.func @_fused_p_sample_loop_kernel(%arg0: memref<2x128xf32, #tpu.memory_space<vmem>>, %arg1: memref<8x2x128xf32, #tpu.memory_space<vmem>>, %arg2: memref<128x128xf32, #tpu.memory_space<vmem>>, %arg3: memref<8x128xf32, #tpu.memory_space<vmem>>, %arg4: memref<128x128xf32, #tpu.memory_space<vmem>>, %arg5: memref<128x128xf32, #tpu.memory_space<vmem>>, %arg6: memref<1x128xf32, #tpu.memory_space<vmem>>, %arg7: memref<2x128xf32, #tpu.memory_space<vmem>>, %arg8: memref<1x128xf32, #tpu.memory_space<vmem>>, %arg9: memref<2x128xf32, #tpu.memory_space<vmem>>) attributes {dimension_semantics = [], scalar_prefetch = 0 : i64, scratch_operands = 0 : i64, tpu.core_type = #tpu.core_type<tc>} {
    %c0 = arith.constant 0 : index
    %c0_0 = arith.constant 0 : index
    %0 = vector.load %arg2[%c0, %c0_0] : memref<128x128xf32, #tpu.memory_space<vmem>>, vector<128x128xf32>
    %c0_1 = arith.constant 0 : index
    %c0_2 = arith.constant 0 : index
    %1 = vector.load %arg5[%c0_1, %c0_2] : memref<128x128xf32, #tpu.memory_space<vmem>>, vector<128x128xf32>
    %c0_3 = arith.constant 0 : index
    %c0_4 = arith.constant 0 : index
    %2 = vector.load %arg6[%c0_3, %c0_4] : memref<1x128xf32, #tpu.memory_space<vmem>>, vector<1x128xf32>
    %c0_5 = arith.constant 0 : index
    %c0_6 = arith.constant 0 : index
    %3 = vector.load %arg7[%c0_5, %c0_6] : memref<2x128xf32, #tpu.memory_space<vmem>>, vector<2x128xf32>
    %c0_7 = arith.constant 0 : index
    %c0_8 = arith.constant 0 : index
    %4 = vector.load %arg8[%c0_7, %c0_8] : memref<1x128xf32, #tpu.memory_space<vmem>>, vector<1x128xf32>
    %cst = arith.constant 5.000000e-01 : f32
    %5 = vector.broadcast %cst : f32 to vector<1x128xf32>
    %6 = arith.cmpf ogt, %4, %5 : vector<1x128xf32>
    %c0_9 = arith.constant 0 : index
    %c0_10 = arith.constant 0 : index
    %7 = vector.load %arg4[%c0_9, %c0_10] : memref<128x128xf32, #tpu.memory_space<vmem>>, vector<128x128xf32>
    %cst_11 = arith.constant dense<0.000000e+00> : vector<2x128xf32>
    %8 = tpu.matmul %3, %7, %cst_11 {dimension_numbers = #tpu.dot_dimension_numbers<[1], [0], [0], [1], [0, 0, 1, 1], [], []>} : vector<2x128xf32>, vector<128x128xf32>, vector<2x128xf32> -> vector<2x128xf32>
    %c0_12 = arith.constant 0 : index
    %c0_13 = arith.constant 0 : index
    %9 = vector.load %arg0[%c0_12, %c0_13] : memref<2x128xf32, #tpu.memory_space<vmem>>, vector<2x128xf32>
    %10 = vector.shape_cast %6 : vector<1x128xi1> to vector<1x128xi1>
    %11 = vector.broadcast %10 : vector<1x128xi1> to vector<2x128xi1>
    %12 = arith.select %11, %3, %9 : vector<2x128xi1>, vector<2x128xf32>
    %cst_14 = arith.constant dense<0.000000e+00> : vector<2x128xf32>
    %13 = tpu.matmul %12, %0, %cst_14 {dimension_numbers = #tpu.dot_dimension_numbers<[1], [0], [0], [1], [0, 0, 1, 1], [], []>} : vector<2x128xf32>, vector<128x128xf32>, vector<2x128xf32> -> vector<2x128xf32>
    %c7 = arith.constant 7 : index
    %c0_15 = arith.constant 0 : index
    %14 = vector.load %arg3[%c7, %c0_15] : memref<8x128xf32, #tpu.memory_space<vmem>>, vector<1x128xf32>
    %15 = vector.broadcast %14 : vector<1x128xf32> to vector<2x128xf32>
    %16 = arith.addf %13, %15 : vector<2x128xf32>
    %cst_16 = arith.constant 0.000000e+00 : f32
    %17 = vector.broadcast %cst_16 : f32 to vector<2x128xf32>
    %18 = arith.maximumf %16, %17 : vector<2x128xf32>
    %19 = arith.addf %16, %8 : vector<2x128xf32>
    %cst_17 = arith.constant 0.000000e+00 : f32
    %20 = vector.broadcast %cst_17 : f32 to vector<2x128xf32>
    %21 = arith.maximumf %19, %20 : vector<2x128xf32>
    %cst_18 = arith.constant -2.000000e-01 : f32
    %22 = vector.broadcast %cst_18 : f32 to vector<2x128xf32>
    %23 = arith.mulf %22, %18 : vector<2x128xf32>
    %cst_19 = arith.constant 1.200000e+00 : f32
    %24 = vector.broadcast %cst_19 : f32 to vector<2x128xf32>
    %25 = arith.mulf %24, %21 : vector<2x128xf32>
    %26 = arith.addf %23, %25 : vector<2x128xf32>
    %cst_20 = arith.constant dense<0.000000e+00> : vector<2x128xf32>
    %27 = tpu.matmul %26, %1, %cst_20 {dimension_numbers = #tpu.dot_dimension_numbers<[1], [0], [0], [1], [0, 0, 1, 1], [], []>} : vector<2x128xf32>, vector<128x128xf32>, vector<2x128xf32> -> vector<2x128xf32>
    %28 = vector.broadcast %2 : vector<1x128xf32> to vector<2x128xf32>
    %29 = arith.addf %27, %28 : vector<2x128xf32>
    %cst_21 = arith.constant 31.6229801 : f32
    %30 = vector.broadcast %cst_21 : f32 to vector<2x128xf32>
    %31 = arith.mulf %30, %12 : vector<2x128xf32>
    %cst_22 = arith.constant 31.5919495 : f32
    %32 = vector.broadcast %cst_22 : f32 to vector<2x128xf32>
    %33 = arith.mulf %32, %29 : vector<2x128xf32>
    %34 = arith.subf %31, %33 : vector<2x128xf32>
    %c7_23 = arith.constant 7 : index
    %c0_24 = arith.constant 0 : index
    %c0_25 = arith.constant 0 : index
    %35 = vector.load %arg1[%c7_23, %c0_24, %c0_25] : memref<8x2x128xf32, #tpu.memory_space<vmem>>, vector<1x2x128xf32>
    %36 = vector.shape_cast %35 : vector<1x2x128xf32> to vector<2x128xf32>
    %cst_26 = arith.constant 0.980612874 : f32
    %37 = vector.broadcast %cst_26 : f32 to vector<2x128xf32>
    %38 = arith.mulf %37, %36 : vector<2x128xf32>
    %39 = arith.addf %34, %38 : vector<2x128xf32>
    %40 = vector.shape_cast %6 : vector<1x128xi1> to vector<1x128xi1>
    %41 = vector.broadcast %40 : vector<1x128xi1> to vector<2x128xi1>
    %42 = arith.select %41, %3, %39 : vector<2x128xi1>, vector<2x128xf32>
    %cst_27 = arith.constant dense<0.000000e+00> : vector<2x128xf32>
    %43 = tpu.matmul %42, %0, %cst_27 {dimension_numbers = #tpu.dot_dimension_numbers<[1], [0], [0], [1], [0, 0, 1, 1], [], []>} : vector<2x128xf32>, vector<128x128xf32>, vector<2x128xf32> -> vector<2x128xf32>
    %c6 = arith.constant 6 : index
    %c0_28 = arith.constant 0 : index
    %44 = vector.load %arg3[%c6, %c0_28] : memref<8x128xf32, #tpu.memory_space<vmem>>, vector<1x128xf32>
    %45 = vector.broadcast %44 : vector<1x128xf32> to vector<2x128xf32>
    %46 = arith.addf %43, %45 : vector<2x128xf32>
    %cst_29 = arith.constant 0.000000e+00 : f32
    %47 = vector.broadcast %cst_29 : f32 to vector<2x128xf32>
    %48 = arith.maximumf %46, %47 : vector<2x128xf32>
    %49 = arith.addf %46, %8 : vector<2x128xf32>
    %cst_30 = arith.constant 0.000000e+00 : f32
    %50 = vector.broadcast %cst_30 : f32 to vector<2x128xf32>
    %51 = arith.maximumf %49, %50 : vector<2x128xf32>
    %cst_31 = arith.constant -2.000000e-01 : f32
    %52 = vector.broadcast %cst_31 : f32 to vector<2x128xf32>
    %53 = arith.mulf %52, %48 : vector<2x128xf32>
    %cst_32 = arith.constant 1.200000e+00 : f32
    %54 = vector.broadcast %cst_32 : f32 to vector<2x128xf32>
    %55 = arith.mulf %54, %51 : vector<2x128xf32>
    %56 = arith.addf %53, %55 : vector<2x128xf32>
    %cst_33 = arith.constant dense<0.000000e+00> : vector<2x128xf32>
    %57 = tpu.matmul %56, %1, %cst_33 {dimension_numbers = #tpu.dot_dimension_numbers<[1], [0], [0], [1], [0, 0, 1, 1], [], []>} : vector<2x128xf32>, vector<128x128xf32>, vector<2x128xf32> -> vector<2x128xf32>
    %58 = vector.broadcast %2 : vector<1x128xf32> to vector<2x128xf32>
    %59 = arith.addf %57, %58 : vector<2x128xf32>
    %cst_34 = arith.constant 1.9621762 : f32
    %60 = vector.broadcast %cst_34 : f32 to vector<2x128xf32>
    %61 = arith.mulf %60, %42 : vector<2x128xf32>
    %cst_35 = arith.constant 1.4805423 : f32
    %62 = vector.broadcast %cst_35 : f32 to vector<2x128xf32>
    %63 = arith.mulf %62, %59 : vector<2x128xf32>
    %64 = arith.subf %61, %63 : vector<2x128xf32>
    %c6_36 = arith.constant 6 : index
    %c0_37 = arith.constant 0 : index
    %c0_38 = arith.constant 0 : index
    %65 = vector.load %arg1[%c6_36, %c0_37, %c0_38] : memref<8x2x128xf32, #tpu.memory_space<vmem>>, vector<1x2x128xf32>
    %66 = vector.shape_cast %65 : vector<1x2x128xf32> to vector<2x128xf32>
    %cst_39 = arith.constant 0.811252236 : f32
    %67 = vector.broadcast %cst_39 : f32 to vector<2x128xf32>
    %68 = arith.mulf %67, %66 : vector<2x128xf32>
    %69 = arith.addf %64, %68 : vector<2x128xf32>
    %70 = vector.shape_cast %6 : vector<1x128xi1> to vector<1x128xi1>
    %71 = vector.broadcast %70 : vector<1x128xi1> to vector<2x128xi1>
    %72 = arith.select %71, %3, %69 : vector<2x128xi1>, vector<2x128xf32>
    %cst_40 = arith.constant dense<0.000000e+00> : vector<2x128xf32>
    %73 = tpu.matmul %72, %0, %cst_40 {dimension_numbers = #tpu.dot_dimension_numbers<[1], [0], [0], [1], [0, 0, 1, 1], [], []>} : vector<2x128xf32>, vector<128x128xf32>, vector<2x128xf32> -> vector<2x128xf32>
    %c5 = arith.constant 5 : index
    %c0_41 = arith.constant 0 : index
    %74 = vector.load %arg3[%c5, %c0_41] : memref<8x128xf32, #tpu.memory_space<vmem>>, vector<1x128xf32>
    %75 = vector.broadcast %74 : vector<1x128xf32> to vector<2x128xf32>
    %76 = arith.addf %73, %75 : vector<2x128xf32>
    %cst_42 = arith.constant 0.000000e+00 : f32
    %77 = vector.broadcast %cst_42 : f32 to vector<2x128xf32>
    %78 = arith.maximumf %76, %77 : vector<2x128xf32>
    %79 = arith.addf %76, %8 : vector<2x128xf32>
    %cst_43 = arith.constant 0.000000e+00 : f32
    %80 = vector.broadcast %cst_43 : f32 to vector<2x128xf32>
    %81 = arith.maximumf %79, %80 : vector<2x128xf32>
    %cst_44 = arith.constant -2.000000e-01 : f32
    %82 = vector.broadcast %cst_44 : f32 to vector<2x128xf32>
    %83 = arith.mulf %82, %78 : vector<2x128xf32>
    %cst_45 = arith.constant 1.200000e+00 : f32
    %84 = vector.broadcast %cst_45 : f32 to vector<2x128xf32>
    %85 = arith.mulf %84, %81 : vector<2x128xf32>
    %86 = arith.addf %83, %85 : vector<2x128xf32>
    %cst_46 = arith.constant dense<0.000000e+00> : vector<2x128xf32>
    %87 = tpu.matmul %86, %1, %cst_46 {dimension_numbers = #tpu.dot_dimension_numbers<[1], [0], [0], [1], [0, 0, 1, 1], [], []>} : vector<2x128xf32>, vector<128x128xf32>, vector<2x128xf32> -> vector<2x128xf32>
    %88 = vector.broadcast %2 : vector<1x128xf32> to vector<2x128xf32>
    %89 = arith.addf %87, %88 : vector<2x128xf32>
    %cst_47 = arith.constant 1.45253801 : f32
    %90 = vector.broadcast %cst_47 : f32 to vector<2x128xf32>
    %91 = arith.mulf %90, %72 : vector<2x128xf32>
    %cst_48 = arith.constant 0.825991213 : f32
    %92 = vector.broadcast %cst_48 : f32 to vector<2x128xf32>
    %93 = arith.mulf %92, %89 : vector<2x128xf32>
    %94 = arith.subf %91, %93 : vector<2x128xf32>
    %c5_49 = arith.constant 5 : index
    %c0_50 = arith.constant 0 : index
    %c0_51 = arith.constant 0 : index
    %95 = vector.load %arg1[%c5_49, %c0_50, %c0_51] : memref<8x2x128xf32, #tpu.memory_space<vmem>>, vector<1x2x128xf32>
    %96 = vector.shape_cast %95 : vector<1x2x128xf32> to vector<2x128xf32>
    %cst_52 = arith.constant 0.653915167 : f32
    %97 = vector.broadcast %cst_52 : f32 to vector<2x128xf32>
    %98 = arith.mulf %97, %96 : vector<2x128xf32>
    %99 = arith.addf %94, %98 : vector<2x128xf32>
    %100 = vector.shape_cast %6 : vector<1x128xi1> to vector<1x128xi1>
    %101 = vector.broadcast %100 : vector<1x128xi1> to vector<2x128xi1>
    %102 = arith.select %101, %3, %99 : vector<2x128xi1>, vector<2x128xf32>
    %cst_53 = arith.constant dense<0.000000e+00> : vector<2x128xf32>
    %103 = tpu.matmul %102, %0, %cst_53 {dimension_numbers = #tpu.dot_dimension_numbers<[1], [0], [0], [1], [0, 0, 1, 1], [], []>} : vector<2x128xf32>, vector<128x128xf32>, vector<2x128xf32> -> vector<2x128xf32>
    %c4 = arith.constant 4 : index
    %c0_54 = arith.constant 0 : index
    %104 = vector.load %arg3[%c4, %c0_54] : memref<8x128xf32, #tpu.memory_space<vmem>>, vector<1x128xf32>
    %105 = vector.broadcast %104 : vector<1x128xf32> to vector<2x128xf32>
    %106 = arith.addf %103, %105 : vector<2x128xf32>
    %cst_55 = arith.constant 0.000000e+00 : f32
    %107 = vector.broadcast %cst_55 : f32 to vector<2x128xf32>
    %108 = arith.maximumf %106, %107 : vector<2x128xf32>
    %109 = arith.addf %106, %8 : vector<2x128xf32>
    %cst_56 = arith.constant 0.000000e+00 : f32
    %110 = vector.broadcast %cst_56 : f32 to vector<2x128xf32>
    %111 = arith.maximumf %109, %110 : vector<2x128xf32>
    %cst_57 = arith.constant -2.000000e-01 : f32
    %112 = vector.broadcast %cst_57 : f32 to vector<2x128xf32>
    %113 = arith.mulf %112, %108 : vector<2x128xf32>
    %cst_58 = arith.constant 1.200000e+00 : f32
    %114 = vector.broadcast %cst_58 : f32 to vector<2x128xf32>
    %115 = arith.mulf %114, %111 : vector<2x128xf32>
    %116 = arith.addf %113, %115 : vector<2x128xf32>
    %cst_59 = arith.constant dense<0.000000e+00> : vector<2x128xf32>
    %117 = tpu.matmul %116, %1, %cst_59 {dimension_numbers = #tpu.dot_dimension_numbers<[1], [0], [0], [1], [0, 0, 1, 1], [], []>} : vector<2x128xf32>, vector<128x128xf32>, vector<2x128xf32> -> vector<2x128xf32>
    %118 = vector.broadcast %2 : vector<1x128xf32> to vector<2x128xf32>
    %119 = arith.addf %117, %118 : vector<2x128xf32>
    %cst_60 = arith.constant 1.27372611 : f32
    %120 = vector.broadcast %cst_60 : f32 to vector<2x128xf32>
    %121 = arith.mulf %120, %102 : vector<2x128xf32>
    %cst_61 = arith.constant 0.585864067 : f32
    %122 = vector.broadcast %cst_61 : f32 to vector<2x128xf32>
    %123 = arith.mulf %122, %119 : vector<2x128xf32>
    %124 = arith.subf %121, %123 : vector<2x128xf32>
    %c4_62 = arith.constant 4 : index
    %c0_63 = arith.constant 0 : index
    %c0_64 = arith.constant 0 : index
    %125 = vector.load %arg1[%c4_62, %c0_63, %c0_64] : memref<8x2x128xf32, #tpu.memory_space<vmem>>, vector<1x2x128xf32>
    %126 = vector.shape_cast %125 : vector<1x2x128xf32> to vector<2x128xf32>
    %cst_65 = arith.constant 0.528338313 : f32
    %127 = vector.broadcast %cst_65 : f32 to vector<2x128xf32>
    %128 = arith.mulf %127, %126 : vector<2x128xf32>
    %129 = arith.addf %124, %128 : vector<2x128xf32>
    %130 = vector.shape_cast %6 : vector<1x128xi1> to vector<1x128xi1>
    %131 = vector.broadcast %130 : vector<1x128xi1> to vector<2x128xi1>
    %132 = arith.select %131, %3, %129 : vector<2x128xi1>, vector<2x128xf32>
    %cst_66 = arith.constant dense<0.000000e+00> : vector<2x128xf32>
    %133 = tpu.matmul %132, %0, %cst_66 {dimension_numbers = #tpu.dot_dimension_numbers<[1], [0], [0], [1], [0, 0, 1, 1], [], []>} : vector<2x128xf32>, vector<128x128xf32>, vector<2x128xf32> -> vector<2x128xf32>
    %c3 = arith.constant 3 : index
    %c0_67 = arith.constant 0 : index
    %134 = vector.load %arg3[%c3, %c0_67] : memref<8x128xf32, #tpu.memory_space<vmem>>, vector<1x128xf32>
    %135 = vector.broadcast %134 : vector<1x128xf32> to vector<2x128xf32>
    %136 = arith.addf %133, %135 : vector<2x128xf32>
    %cst_68 = arith.constant 0.000000e+00 : f32
    %137 = vector.broadcast %cst_68 : f32 to vector<2x128xf32>
    %138 = arith.maximumf %136, %137 : vector<2x128xf32>
    %139 = arith.addf %136, %8 : vector<2x128xf32>
    %cst_69 = arith.constant 0.000000e+00 : f32
    %140 = vector.broadcast %cst_69 : f32 to vector<2x128xf32>
    %141 = arith.maximumf %139, %140 : vector<2x128xf32>
    %cst_70 = arith.constant -2.000000e-01 : f32
    %142 = vector.broadcast %cst_70 : f32 to vector<2x128xf32>
    %143 = arith.mulf %142, %138 : vector<2x128xf32>
    %cst_71 = arith.constant 1.200000e+00 : f32
    %144 = vector.broadcast %cst_71 : f32 to vector<2x128xf32>
    %145 = arith.mulf %144, %141 : vector<2x128xf32>
    %146 = arith.addf %143, %145 : vector<2x128xf32>
    %cst_72 = arith.constant dense<0.000000e+00> : vector<2x128xf32>
    %147 = tpu.matmul %146, %1, %cst_72 {dimension_numbers = #tpu.dot_dimension_numbers<[1], [0], [0], [1], [0, 0, 1, 1], [], []>} : vector<2x128xf32>, vector<128x128xf32>, vector<2x128xf32> -> vector<2x128xf32>
    %148 = vector.broadcast %2 : vector<1x128xf32> to vector<2x128xf32>
    %149 = arith.addf %147, %148 : vector<2x128xf32>
    %cst_73 = arith.constant 1.17707801 : f32
    %150 = vector.broadcast %cst_73 : f32 to vector<2x128xf32>
    %151 = arith.mulf %150, %132 : vector<2x128xf32>
    %cst_74 = arith.constant 0.460353076 : f32
    %152 = vector.broadcast %cst_74 : f32 to vector<2x128xf32>
    %153 = arith.mulf %152, %149 : vector<2x128xf32>
    %154 = arith.subf %151, %153 : vector<2x128xf32>
    %c3_75 = arith.constant 3 : index
    %c0_76 = arith.constant 0 : index
    %c0_77 = arith.constant 0 : index
    %155 = vector.load %arg1[%c3_75, %c0_76, %c0_77] : memref<8x2x128xf32, #tpu.memory_space<vmem>>, vector<1x2x128xf32>
    %156 = vector.shape_cast %155 : vector<1x2x128xf32> to vector<2x128xf32>
    %cst_78 = arith.constant 0.416638613 : f32
    %157 = vector.broadcast %cst_78 : f32 to vector<2x128xf32>
    %158 = arith.mulf %157, %156 : vector<2x128xf32>
    %159 = arith.addf %154, %158 : vector<2x128xf32>
    %160 = vector.shape_cast %6 : vector<1x128xi1> to vector<1x128xi1>
    %161 = vector.broadcast %160 : vector<1x128xi1> to vector<2x128xi1>
    %162 = arith.select %161, %3, %159 : vector<2x128xi1>, vector<2x128xf32>
    %cst_79 = arith.constant dense<0.000000e+00> : vector<2x128xf32>
    %163 = tpu.matmul %162, %0, %cst_79 {dimension_numbers = #tpu.dot_dimension_numbers<[1], [0], [0], [1], [0, 0, 1, 1], [], []>} : vector<2x128xf32>, vector<128x128xf32>, vector<2x128xf32> -> vector<2x128xf32>
    %c2 = arith.constant 2 : index
    %c0_80 = arith.constant 0 : index
    %164 = vector.load %arg3[%c2, %c0_80] : memref<8x128xf32, #tpu.memory_space<vmem>>, vector<1x128xf32>
    %165 = vector.broadcast %164 : vector<1x128xf32> to vector<2x128xf32>
    %166 = arith.addf %163, %165 : vector<2x128xf32>
    %cst_81 = arith.constant 0.000000e+00 : f32
    %167 = vector.broadcast %cst_81 : f32 to vector<2x128xf32>
    %168 = arith.maximumf %166, %167 : vector<2x128xf32>
    %169 = arith.addf %166, %8 : vector<2x128xf32>
    %cst_82 = arith.constant 0.000000e+00 : f32
    %170 = vector.broadcast %cst_82 : f32 to vector<2x128xf32>
    %171 = arith.maximumf %169, %170 : vector<2x128xf32>
    %cst_83 = arith.constant -2.000000e-01 : f32
    %172 = vector.broadcast %cst_83 : f32 to vector<2x128xf32>
    %173 = arith.mulf %172, %168 : vector<2x128xf32>
    %cst_84 = arith.constant 1.200000e+00 : f32
    %174 = vector.broadcast %cst_84 : f32 to vector<2x128xf32>
    %175 = arith.mulf %174, %171 : vector<2x128xf32>
    %176 = arith.addf %173, %175 : vector<2x128xf32>
    %cst_85 = arith.constant dense<0.000000e+00> : vector<2x128xf32>
    %177 = tpu.matmul %176, %1, %cst_85 {dimension_numbers = #tpu.dot_dimension_numbers<[1], [0], [0], [1], [0, 0, 1, 1], [], []>} : vector<2x128xf32>, vector<128x128xf32>, vector<2x128xf32> -> vector<2x128xf32>
    %178 = vector.broadcast %2 : vector<1x128xf32> to vector<2x128xf32>
    %179 = arith.addf %177, %178 : vector<2x128xf32>
    %cst_86 = arith.constant 1.11261487 : f32
    %180 = vector.broadcast %cst_86 : f32 to vector<2x128xf32>
    %181 = arith.mulf %180, %162 : vector<2x128xf32>
    %cst_87 = arith.constant 0.380525172 : f32
    %182 = vector.broadcast %cst_87 : f32 to vector<2x128xf32>
    %183 = arith.mulf %182, %179 : vector<2x128xf32>
    %184 = arith.subf %181, %183 : vector<2x128xf32>
    %c2_88 = arith.constant 2 : index
    %c0_89 = arith.constant 0 : index
    %c0_90 = arith.constant 0 : index
    %185 = vector.load %arg1[%c2_88, %c0_89, %c0_90] : memref<8x2x128xf32, #tpu.memory_space<vmem>>, vector<1x2x128xf32>
    %186 = vector.shape_cast %185 : vector<1x2x128xf32> to vector<2x128xf32>
    %cst_91 = arith.constant 0.305143297 : f32
    %187 = vector.broadcast %cst_91 : f32 to vector<2x128xf32>
    %188 = arith.mulf %187, %186 : vector<2x128xf32>
    %189 = arith.addf %184, %188 : vector<2x128xf32>
    %190 = vector.shape_cast %6 : vector<1x128xi1> to vector<1x128xi1>
    %191 = vector.broadcast %190 : vector<1x128xi1> to vector<2x128xi1>
    %192 = arith.select %191, %3, %189 : vector<2x128xi1>, vector<2x128xf32>
    %cst_92 = arith.constant dense<0.000000e+00> : vector<2x128xf32>
    %193 = tpu.matmul %192, %0, %cst_92 {dimension_numbers = #tpu.dot_dimension_numbers<[1], [0], [0], [1], [0, 0, 1, 1], [], []>} : vector<2x128xf32>, vector<128x128xf32>, vector<2x128xf32> -> vector<2x128xf32>
    %c1 = arith.constant 1 : index
    %c0_93 = arith.constant 0 : index
    %194 = vector.load %arg3[%c1, %c0_93] : memref<8x128xf32, #tpu.memory_space<vmem>>, vector<1x128xf32>
    %195 = vector.broadcast %194 : vector<1x128xf32> to vector<2x128xf32>
    %196 = arith.addf %193, %195 : vector<2x128xf32>
    %cst_94 = arith.constant 0.000000e+00 : f32
    %197 = vector.broadcast %cst_94 : f32 to vector<2x128xf32>
    %198 = arith.maximumf %196, %197 : vector<2x128xf32>
    %199 = arith.addf %196, %8 : vector<2x128xf32>
    %cst_95 = arith.constant 0.000000e+00 : f32
    %200 = vector.broadcast %cst_95 : f32 to vector<2x128xf32>
    %201 = arith.maximumf %199, %200 : vector<2x128xf32>
    %cst_96 = arith.constant -2.000000e-01 : f32
    %202 = vector.broadcast %cst_96 : f32 to vector<2x128xf32>
    %203 = arith.mulf %202, %198 : vector<2x128xf32>
    %cst_97 = arith.constant 1.200000e+00 : f32
    %204 = vector.broadcast %cst_97 : f32 to vector<2x128xf32>
    %205 = arith.mulf %204, %201 : vector<2x128xf32>
    %206 = arith.addf %203, %205 : vector<2x128xf32>
    %cst_98 = arith.constant dense<0.000000e+00> : vector<2x128xf32>
    %207 = tpu.matmul %206, %1, %cst_98 {dimension_numbers = #tpu.dot_dimension_numbers<[1], [0], [0], [1], [0, 0, 1, 1], [], []>} : vector<2x128xf32>, vector<128x128xf32>, vector<2x128xf32> -> vector<2x128xf32>
    %208 = vector.broadcast %2 : vector<1x128xf32> to vector<2x128xf32>
    %209 = arith.addf %207, %208 : vector<2x128xf32>
    %cst_99 = arith.constant 1.06339264 : f32
    %210 = vector.broadcast %cst_99 : f32 to vector<2x128xf32>
    %211 = arith.mulf %210, %192 : vector<2x128xf32>
    %cst_100 = arith.constant 0.314483851 : f32
    %212 = vector.broadcast %cst_100 : f32 to vector<2x128xf32>
    %213 = arith.mulf %212, %209 : vector<2x128xf32>
    %214 = arith.subf %211, %213 : vector<2x128xf32>
    %c1_101 = arith.constant 1 : index
    %c0_102 = arith.constant 0 : index
    %c0_103 = arith.constant 0 : index
    %215 = vector.load %arg1[%c1_101, %c0_102, %c0_103] : memref<8x2x128xf32, #tpu.memory_space<vmem>>, vector<1x2x128xf32>
    %216 = vector.shape_cast %215 : vector<1x2x128xf32> to vector<2x128xf32>
    %cst_104 = arith.constant 0.178616151 : f32
    %217 = vector.broadcast %cst_104 : f32 to vector<2x128xf32>
    %218 = arith.mulf %217, %216 : vector<2x128xf32>
    %219 = arith.addf %214, %218 : vector<2x128xf32>
    %220 = vector.shape_cast %6 : vector<1x128xi1> to vector<1x128xi1>
    %221 = vector.broadcast %220 : vector<1x128xi1> to vector<2x128xi1>
    %222 = arith.select %221, %3, %219 : vector<2x128xi1>, vector<2x128xf32>
    %cst_105 = arith.constant dense<0.000000e+00> : vector<2x128xf32>
    %223 = tpu.matmul %222, %0, %cst_105 {dimension_numbers = #tpu.dot_dimension_numbers<[1], [0], [0], [1], [0, 0, 1, 1], [], []>} : vector<2x128xf32>, vector<128x128xf32>, vector<2x128xf32> -> vector<2x128xf32>
    %c0_106 = arith.constant 0 : index
    %c0_107 = arith.constant 0 : index
    %224 = vector.load %arg3[%c0_106, %c0_107] : memref<8x128xf32, #tpu.memory_space<vmem>>, vector<1x128xf32>
    %225 = vector.broadcast %224 : vector<1x128xf32> to vector<2x128xf32>
    %226 = arith.addf %223, %225 : vector<2x128xf32>
    %cst_108 = arith.constant 0.000000e+00 : f32
    %227 = vector.broadcast %cst_108 : f32 to vector<2x128xf32>
    %228 = arith.maximumf %226, %227 : vector<2x128xf32>
    %229 = arith.addf %226, %8 : vector<2x128xf32>
    %cst_109 = arith.constant 0.000000e+00 : f32
    %230 = vector.broadcast %cst_109 : f32 to vector<2x128xf32>
    %231 = arith.maximumf %229, %230 : vector<2x128xf32>
    %cst_110 = arith.constant -2.000000e-01 : f32
    %232 = vector.broadcast %cst_110 : f32 to vector<2x128xf32>
    %233 = arith.mulf %232, %228 : vector<2x128xf32>
    %cst_111 = arith.constant 1.200000e+00 : f32
    %234 = vector.broadcast %cst_111 : f32 to vector<2x128xf32>
    %235 = arith.mulf %234, %231 : vector<2x128xf32>
    %236 = arith.addf %233, %235 : vector<2x128xf32>
    %cst_112 = arith.constant dense<0.000000e+00> : vector<2x128xf32>
    %237 = tpu.matmul %236, %1, %cst_112 {dimension_numbers = #tpu.dot_dimension_numbers<[1], [0], [0], [1], [0, 0, 1, 1], [], []>} : vector<2x128xf32>, vector<128x128xf32>, vector<2x128xf32> -> vector<2x128xf32>
    %238 = vector.broadcast %2 : vector<1x128xf32> to vector<2x128xf32>
    %239 = arith.addf %237, %238 : vector<2x128xf32>
    %cst_113 = arith.constant 1.02178979 : f32
    %240 = vector.broadcast %cst_113 : f32 to vector<2x128xf32>
    %241 = arith.mulf %240, %222 : vector<2x128xf32>
    %cst_114 = arith.constant 0.209891155 : f32
    %242 = vector.broadcast %cst_114 : f32 to vector<2x128xf32>
    %243 = arith.mulf %242, %239 : vector<2x128xf32>
    %244 = arith.subf %241, %243 : vector<2x128xf32>
    %c0_115 = arith.constant 0 : index
    %c0_116 = arith.constant 0 : index
    %c0_117 = arith.constant 0 : index
    %245 = vector.load %arg1[%c0_115, %c0_116, %c0_117] : memref<8x2x128xf32, #tpu.memory_space<vmem>>, vector<1x2x128xf32>
    %246 = vector.shape_cast %245 : vector<1x2x128xf32> to vector<2x128xf32>
    %cst_118 = arith.constant 0.000000e+00 : f32
    %247 = vector.broadcast %cst_118 : f32 to vector<2x128xf32>
    %248 = arith.mulf %247, %246 : vector<2x128xf32>
    %249 = arith.addf %244, %248 : vector<2x128xf32>
    %250 = vector.shape_cast %6 : vector<1x128xi1> to vector<1x128xi1>
    %251 = vector.broadcast %250 : vector<1x128xi1> to vector<2x128xi1>
    %252 = arith.select %251, %3, %249 : vector<2x128xi1>, vector<2x128xf32>
    %c0_119 = arith.constant 0 : index
    %c0_120 = arith.constant 0 : index
    %253 = vector.load %arg9[%c0_119, %c0_120] : memref<2x128xf32, #tpu.memory_space<vmem>>, vector<2x128xf32>
    tpu.vector_store %arg9[%c0_119, %c0_120], %252 {strides = array<i32>} : memref<2x128xf32, #tpu.memory_space<vmem>>, vector<2x128xf32>,
    return
  }
}

</mosaic_0001>

<llo_original>
// kernel: _sample_impl.1
$region0: #{_sample_impl.1}
  #allocation0 [shape = 'u32[]', space=smem, size = 0x4, offset = 0x4, fixed_abs, tag = 'smem constant byte address 0x4 - core index']
  #allocation1 [shape = 'u32[144,128]{1,0:T(1,128)}', space=vmem, size = 0x12000, scoped, tag = 'internal scratch']
  %s0 = inlined_call_operand.vmem [shape: f32[2,128], index: 0, kind: input, shape index: {}]
  %s1 = inlined_call_operand.vmem [shape: f32[8,2,128], index: 1, kind: input, shape index: {}]
  %s2 = inlined_call_operand.vmem [shape: f32[128,128], index: 2, kind: input, shape index: {}]
  %s3 = inlined_call_operand.vmem [shape: f32[8,128], index: 3, kind: input, shape index: {}]
  %s4 = inlined_call_operand.hbm [shape: f32[128,128], index: 4, kind: input, shape index: {}]
  %s5 = inlined_call_operand.hbm [shape: f32[128,128], index: 5, kind: input, shape index: {}]
  %s6 = inlined_call_operand.vmem [shape: f32[1,128], index: 6, kind: input, shape index: {}]
  %s7 = inlined_call_operand.vmem [shape: f32[2,128], index: 7, kind: input, shape index: {}]
  %s8 = inlined_call_operand.vmem [shape: f32[1,128], index: 8, kind: input, shape index: {}]
  %s9 = inlined_call_operand.vmem [shape: f32[2,128], index: 9, kind: output, shape index: {}]
  %s10 = sld [smem:[#allocation0]]
  $region54: #{_sample_impl.1} parent=0
    _
  %s12 = ssub.s32 1, %s10
  %s13 = scalar_select 0, %s12, %s10
  $region1: #{_sample_impl.1} parent=0
    #allocation2 [shape = 'u8[65536]{0}', space=vmem, size = 0x10000, scoped, tag = 'input window, operand 4, single buffered']
    #allocation3 [shape = 's32[1]{0}', space=sflag, size = 0x4, scoped, tag = 'scoped memory for _sample_impl.1']
    #allocation4 [shape = 'u8[65536]{0}', space=vmem, size = 0x10000, scoped, tag = 'input window, operand 5, single buffered']
    #allocation5 [shape = 's32[1]{0}', space=sflag, size = 0x4, scoped, tag = 'scoped memory for _sample_impl.1']
    %14 = vsyncpa [#allocation3], 0
    %15 = vsyncpa [#allocation5], 0
    // Predicated region
    $region2: #{_sample_impl.1} parent=1 // pred_check
      _
    $region3: #{_sample_impl.1} parent=1 // pred_check_branch
      %17 = sbr.rel (0) target = $region5
    $region4: #{_sample_impl.1} parent=1 // pred_region
      _
    $region5: #{_sample_impl.1} parent=1 // pred_fallthru
      _
    // Predicated region
    $region6: #{_sample_impl.1} parent=1 // pred_check
      _
    $region7: #{_sample_impl.1} parent=1 // pred_check_branch
      %19 = sbr.rel (0) target = $region9
    $region8: #{_sample_impl.1} parent=1 // pred_region
      _
    $region9: #{_sample_impl.1} parent=1 // pred_fallthru
      _
    // Predicated region
    $region10: #{_sample_impl.1} parent=1 // pred_check
      _
    $region11: #{_sample_impl.1} parent=1 // pred_check_branch
      %21 = sbr.rel (0) target = $region13
    $region12: #{_sample_impl.1} parent=1 // pred_region
      _
    $region13: #{_sample_impl.1} parent=1 // pred_fallthru
      _
    // Predicated region
    $region14: #{_sample_impl.1} parent=1 // pred_check
      _
    $region15: #{_sample_impl.1} parent=1 // pred_check_branch
      %23 = sbr.rel (0) target = $region17
    $region16: #{_sample_impl.1} parent=1 // pred_region
      _
    $region17: #{_sample_impl.1} parent=1 // pred_fallthru
      _
    // Predicated region
    $region18: #{_sample_impl.1} parent=1 // pred_check
      _
    $region19: #{_sample_impl.1} parent=1 // pred_check_branch
      %25 = sbr.rel (0) target = $region21
    $region20: #{_sample_impl.1} parent=1 // pred_region
      %s27 = ssub.s32 2048, 2048
      %28 = vsyncadd [#allocation3], %s27
      %s29 = sshll.u32 [#allocation2], 4
      %s30 = int_to_ptr.vmem [resolvable:$true] %s29
      %35 = dma.hbm_to_vmem [thread:$0]  %s4, 2048, %s30, [#allocation3], 128, 128, 8
    $region21: #{_sample_impl.1} parent=1 // pred_fallthru
      _
    // Predicated region
    $region22: #{_sample_impl.1} parent=1 // pred_check
      _
    $region23: #{_sample_impl.1} parent=1 // pred_check_branch
      %37 = sbr.rel (0) target = $region25
    $region24: #{_sample_impl.1} parent=1 // pred_region
      %s39 = ssub.s32 2048, 2048
      %40 = vsyncadd [#allocation5], %s39
      %s41 = sshll.u32 [#allocation4], 4
      %s42 = int_to_ptr.vmem [resolvable:$true] %s41
      %47 = dma.hbm_to_vmem [thread:$0]  %s5, 2048, %s42, [#allocation5], 128, 128, 8
    $region25: #{_sample_impl.1} parent=1 // pred_fallthru
      _
    // Predicated region
    $region26: #{_sample_impl.1} parent=1 // pred_check
      _
    $region27: #{_sample_impl.1} parent=1 // pred_check_branch
      %49 = sbr.rel (0) target = $region29
    $region28: #{_sample_impl.1} parent=1 // pred_region
      _
    $region29: #{_sample_impl.1} parent=1 // pred_fallthru
      _
    // Predicated region
    $region30: #{_sample_impl.1} parent=1 // pred_check
      _
    $region31: #{_sample_impl.1} parent=1 // pred_check_branch
      %51 = sbr.rel (0) target = $region33
    $region32: #{_sample_impl.1} parent=1 // pred_region
      _
    $region33: #{_sample_impl.1} parent=1 // pred_fallthru
      _
    // Predicated region
    $region34: #{_sample_impl.1} parent=1 // pred_check
      _
    $region35: #{_sample_impl.1} parent=1 // pred_check_branch
      %53 = sbr.rel (0) target = $region37
    $region36: #{_sample_impl.1} parent=1 // pred_region
      _
    $region37: #{_sample_impl.1} parent=1 // pred_fallthru
      _
    // Predicated region
    $region38: #{_sample_impl.1} parent=1 // pred_check
      _
    $region39: #{_sample_impl.1} parent=1 // pred_check_branch
      %55 = sbr.rel (0) target = $region41
    $region40: #{_sample_impl.1} parent=1 // pred_region
      %56 = dma.done [#allocation3], 2048
    $region41: #{_sample_impl.1} parent=1 // pred_fallthru
      _
    // Predicated region
    $region42: #{_sample_impl.1} parent=1 // pred_check
      _
    $region43: #{_sample_impl.1} parent=1 // pred_check_branch
      %58 = sbr.rel (0) target = $region45
    $region44: #{_sample_impl.1} parent=1 // pred_region
      %59 = dma.done [#allocation5], 2048
    $region45: #{_sample_impl.1} parent=1 // pred_fallthru
      _
    %v60 = vld [vmem:[%s2] sm:$0xff]
    %v61 = vld [vmem:[%s2 + $0x8] sm:$0xff]
    %v62 = vld [vmem:[%s2 + $0x10] sm:$0xff]
    %v63 = vld [vmem:[%s2 + $0x18] sm:$0xff]
    %v64 = vld [vmem:[%s2 + $0x20] sm:$0xff]
    %v65 = vld [vmem:[%s2 + $0x28] sm:$0xff]
    %v66 = vld [vmem:[%s2 + $0x30] sm:$0xff]
    %v67 = vld [vmem:[%s2 + $0x38] sm:$0xff]
    %v68 = vld [vmem:[%s2 + $0x40] sm:$0xff]
    %v69 = vld [vmem:[%s2 + $0x48] sm:$0xff]
    %v70 = vld [vmem:[%s2 + $0x50] sm:$0xff]
    %v71 = vld [vmem:[%s2 + $0x58] sm:$0xff]
    %v72 = vld [vmem:[%s2 + $0x60] sm:$0xff]
    %v73 = vld [vmem:[%s2 + $0x68] sm:$0xff]
    %v74 = vld [vmem:[%s2 + $0x70] sm:$0xff]
    %v75 = vld [vmem:[%s2 + $0x78] sm:$0xff]
    %v76 = vld [vmem:[#allocation4] sm:$0xff]
    %v77 = vld [vmem:[#allocation4 + $0x8] sm:$0xff]
    %v78 = vld [vmem:[#allocation4 + $0x10] sm:$0xff]
    %v79 = vld [vmem:[#allocation4 + $0x18] sm:$0xff]
    %v80 = vld [vmem:[#allocation4 + $0x20] sm:$0xff]
    %v81 = vld [vmem:[#allocation4 + $0x28] sm:$0xff]
    %v82 = vld [vmem:[#allocation4 + $0x30] sm:$0xff]
    %v83 = vld [vmem:[#allocation4 + $0x38] sm:$0xff]
    %v84 = vld [vmem:[#allocation4 + $0x40] sm:$0xff]
    %v85 = vld [vmem:[#allocation4 + $0x48] sm:$0xff]
    %v86 = vld [vmem:[#allocation4 + $0x50] sm:$0xff]
    %v87 = vld [vmem:[#allocation4 + $0x58] sm:$0xff]
    %v88 = vld [vmem:[#allocation4 + $0x60] sm:$0xff]
    %v89 = vld [vmem:[#allocation4 + $0x68] sm:$0xff]
    %v90 = vld [vmem:[#allocation4 + $0x70] sm:$0xff]
    %v91 = vld [vmem:[#allocation4 + $0x78] sm:$0xff]
    %v92 = vld [vmem:[%s6] sm:$0x1]
    %v93 = vld [vmem:[%s7] sm:$0x3]
    %v94 = vld [vmem:[%s8] sm:$0x1]
    %vm95 = vcmp.gt.f32.partialorder %v94, 0.5
    %v96 = vld [vmem:[#allocation2] sm:$0xff]
    %v97 = vld [vmem:[#allocation2 + $0x8] sm:$0xff]
    %v98 = vld [vmem:[#allocation2 + $0x10] sm:$0xff]
    %v99 = vld [vmem:[#allocation2 + $0x18] sm:$0xff]
    %v100 = vld [vmem:[#allocation2 + $0x20] sm:$0xff]
    %v101 = vld [vmem:[#allocation2 + $0x28] sm:$0xff]
    %v102 = vld [vmem:[#allocation2 + $0x30] sm:$0xff]
    %v103 = vld [vmem:[#allocation2 + $0x38] sm:$0xff]
    %v104 = vld [vmem:[#allocation2 + $0x40] sm:$0xff]
    %v105 = vld [vmem:[#allocation2 + $0x48] sm:$0xff]
    %v106 = vld [vmem:[#allocation2 + $0x50] sm:$0xff]
    %v107 = vld [vmem:[#allocation2 + $0x58] sm:$0xff]
    %v108 = vld [vmem:[#allocation2 + $0x60] sm:$0xff]
    %v109 = vld [vmem:[#allocation2 + $0x68] sm:$0xff]
    %v110 = vld [vmem:[#allocation2 + $0x70] sm:$0xff]
    %v111 = vld [vmem:[#allocation2 + $0x78] sm:$0xff]
    %112 = vmatprep.subr.mxu0 0.0
    %113 = vmatpush1.msra.mxu0 %v111
    %114 = vmatprep.subr.mxu0 0.0
    %115 = vmatpush1.msra.mxu0 %v110
    %116 = vmatprep.subr.mxu0 0.0
    %117 = vmatpush1.msra.mxu0 %v109
    %118 = vmatprep.subr.mxu0 0.0
    %119 = vmatpush1.msra.mxu0 %v108
    %120 = vmatprep.subr.mxu0 0.0
    %121 = vmatpush1.msra.mxu0 %v107
    %122 = vmatprep.subr.mxu0 0.0
    %123 = vmatpush1.msra.mxu0 %v106
    %124 = vmatprep.subr.mxu0 0.0
    %125 = vmatpush1.msra.mxu0 %v105
    %126 = vmatprep.subr.mxu0 0.0
    %127 = vmatpush1.msra.mxu0 %v104
    %128 = vmatprep.subr.mxu0 0.0
    %129 = vmatpush1.msra.mxu0 %v103
    %130 = vmatprep.subr.mxu0 0.0
    %131 = vmatpush1.msra.mxu0 %v102
    %132 = vmatprep.subr.mxu0 0.0
    %133 = vmatpush1.msra.mxu0 %v101
    %134 = vmatprep.subr.mxu0 0.0
    %135 = vmatpush1.msra.mxu0 %v100
    %136 = vmatprep.subr.mxu0 0.0
    %137 = vmatpush1.msra.mxu0 %v99
    %138 = vmatprep.subr.mxu0 0.0
    %139 = vmatpush1.msra.mxu0 %v98
    %140 = vmatprep.subr.mxu0 0.0
    %141 = vmatpush1.msra.mxu0 %v97
    %142 = vmatprep.subr.mxu0 0.0
    %143 = vmatpush1.msra.mxu0 %v96
    %144 = vmatprep.subr.mxu0 0.0
    %145 = vmatpush2.msra.mxu0 0.0
    %146 = vmatprep.subr.mxu0 0.0
    %147 = vmatpush2.msra.mxu0 0.0
    %148 = vmatprep.subr.mxu0 0.0
    %149 = vmatpush2.msra.mxu0 0.0
    %150 = vmatprep.subr.mxu0 0.0
    %151 = vmatpush2.msra.mxu0 0.0
    %152 = vmatprep.subr.mxu0 0.0
    %153 = vmatpush2.msra.mxu0 0.0
    %154 = vmatprep.subr.mxu0 0.0
    %155 = vmatpush2.msra.mxu0 0.0
    %156 = vmatprep.subr.mxu0 0.0
    %157 = vmatpush2.msra.mxu0 0.0
    %158 = vmatprep.subr.mxu0 0.0
    %159 = vmatpush2.msra.mxu0 0.0
    %160 = vmatprep.subr.mxu0 0.0
    %161 = vmatpush2.msra.mxu0 0.0
    %162 = vmatprep.subr.mxu0 0.0
    %163 = vmatpush2.msra.mxu0 0.0
    %164 = vmatprep.subr.mxu0 0.0
    %165 = vmatpush2.msra.mxu0 0.0
    %166 = vmatprep.subr.mxu0 0.0
    %167 = vmatpush2.msra.mxu0 0.0
    %168 = vmatprep.subr.mxu0 0.0
    %169 = vmatpush2.msra.mxu0 0.0
    %170 = vmatprep.subr.mxu0 0.0
    %171 = vmatpush2.msra.mxu0 0.0
    %172 = vmatprep.subr.mxu0 0.0
    %173 = vmatpush2.msra.mxu0 0.0
    %174 = vmatprep.subr.mxu0 0.0
    %175 = vmatpush2.msra.mxu0 0.0
    %176 = vmatprep.mubr.f32.mxu0 0.0
    %177 = vmatmul.mubr.f32.gmra.mxu0 %v93
    %v178 = vpop.f32.mrf.mxu0
    %v179 = vadd.f32 0.0, %v178
    %v180 = vpop.f32.mrf.mxu0
    %181 = vdwg.mxu0
    %v182 = vld [vmem:[%s0] sm:$0x3]
    %v183 = vsel %vm95, 1, 0
    %v184 = vlaneseq
    %v185 = vshrl.u32 %v184, 7
    %v186 = vsub.s32 0, %v185
    %v187 = vrot.slane %v183, %v186
    %vm188 = vcmp.eq.s32.totalorder %v187, 1
    %v189 = vsel %vm188, %v93, %v182
    %v190 = vld [vmem:[%s3 + $0x7] sm:$0x1]
    %v191 = vlaneseq
    %v192 = vshrl.u32 %v191, 7
    %v193 = vsub.s32 0, %v192
    %v194 = vrot.slane %v190, %v193
    %195 = vmatprep.subr.mxu0 0.0
    %196 = vmatpush1.msra.mxu0 %v75
    %197 = vmatprep.subr.mxu0 0.0
    %198 = vmatpush1.msra.mxu0 %v74
    %199 = vmatprep.subr.mxu0 0.0
    %200 = vmatpush1.msra.mxu0 %v73
    %201 = vmatprep.subr.mxu0 0.0
    %202 = vmatpush1.msra.mxu0 %v72
    %203 = vmatprep.subr.mxu0 0.0
    %204 = vmatpush1.msra.mxu0 %v71
    %205 = vmatprep.subr.mxu0 0.0
    %206 = vmatpush1.msra.mxu0 %v70
    %207 = vmatprep.subr.mxu0 0.0
    %208 = vmatpush1.msra.mxu0 %v69
    %209 = vmatprep.subr.mxu0 0.0
    %210 = vmatpush1.msra.mxu0 %v68
    %211 = vmatprep.subr.mxu0 0.0
    %212 = vmatpush1.msra.mxu0 %v67
    %213 = vmatprep.subr.mxu0 0.0
    %214 = vmatpush1.msra.mxu0 %v66
    %215 = vmatprep.subr.mxu0 0.0
    %216 = vmatpush1.msra.mxu0 %v65
    %217 = vmatprep.subr.mxu0 0.0
    %218 = vmatpush1.msra.mxu0 %v64
    %219 = vmatprep.subr.mxu0 0.0
    %220 = vmatpush1.msra.mxu0 %v63
    %221 = vmatprep.subr.mxu0 0.0
    %222 = vmatpush1.msra.mxu0 %v62
    %223 = vmatprep.subr.mxu0 0.0
    %224 = vmatpush1.msra.mxu0 %v61
    %225 = vmatprep.subr.mxu0 0.0
    %226 = vmatpush1.msra.mxu0 %v60
    %227 = vmatprep.subr.mxu0 0.0
    %228 = vmatpush2.msra.mxu0 0.0
    %229 = vmatprep.subr.mxu0 0.0
    %230 = vmatpush2.msra.mxu0 0.0
    %231 = vmatprep.subr.mxu0 0.0
    %232 = vmatpush2.msra.mxu0 0.0
    %233 = vmatprep.subr.mxu0 0.0
    %234 = vmatpush2.msra.mxu0 0.0
    %235 = vmatprep.subr.mxu0 0.0
    %236 = vmatpush2.msra.mxu0 0.0
    %237 = vmatprep.subr.mxu0 0.0
    %238 = vmatpush2.msra.mxu0 0.0
    %239 = vmatprep.subr.mxu0 0.0
    %240 = vmatpush2.msra.mxu0 0.0
    %241 = vmatprep.subr.mxu0 0.0
    %242 = vmatpush2.msra.mxu0 0.0
    %243 = vmatprep.subr.mxu0 0.0
    %244 = vmatpush2.msra.mxu0 0.0
    %245 = vmatprep.subr.mxu0 0.0
    %246 = vmatpush2.msra.mxu0 0.0
    %247 = vmatprep.subr.mxu0 0.0
    %248 = vmatpush2.msra.mxu0 0.0
    %249 = vmatprep.subr.mxu0 0.0
    %250 = vmatpush2.msra.mxu0 0.0
    %251 = vmatprep.subr.mxu0 0.0
    %252 = vmatpush2.msra.mxu0 0.0
    %253 = vmatprep.subr.mxu0 0.0
    %254 = vmatpush2.msra.mxu0 0.0
    %255 = vmatprep.subr.mxu0 0.0
    %256 = vmatpush2.msra.mxu0 0.0
    %257 = vmatprep.subr.mxu0 0.0
    %258 = vmatpush2.msra.mxu0 0.0
    %259 = vmatprep.mubr.f32.mxu0 0.0
    %260 = vmatmul.mubr.f32.gmra.mxu0 %v189
    %v261 = vpop.f32.mrf.mxu0
    %v262 = vadd.f32 %v194, %v261
    %v263 = vpop.f32.mrf.mxu0
    %264 = vdwg.mxu0
    %v265 = vmax.f32 %v262, 0.0
    %v266 = vadd.f32 %v262, %v179
    %v267 = vmax.f32 %v266, 0.0
    %v268 = vmul.f32 %v265, -0.2
    %v269 = vmul.f32 %v267, 1.2
    %v270 = vadd.f32 %v268, %v269
    %v272 = vlaneseq
    %v273 = vshrl.u32 %v272, 7
    %v274 = vsub.s32 0, %v273
    %v275 = vrot.slane %v92, %v274
    %277 = vmatprep.subr.mxu0 0.0
    %278 = vmatpush1.msra.mxu0 %v91
    %279 = vmatprep.subr.mxu0 0.0
    %280 = vmatpush1.msra.mxu0 %v90
    %281 = vmatprep.subr.mxu0 0.0
    %282 = vmatpush1.msra.mxu0 %v89
    %283 = vmatprep.subr.mxu0 0.0
    %284 = vmatpush1.msra.mxu0 %v88
    %285 = vmatprep.subr.mxu0 0.0
    %286 = vmatpush1.msra.mxu0 %v87
    %287 = vmatprep.subr.mxu0 0.0
    %288 = vmatpush1.msra.mxu0 %v86
    %289 = vmatprep.subr.mxu0 0.0
    %290 = vmatpush1.msra.mxu0 %v85
    %291 = vmatprep.subr.mxu0 0.0
    %292 = vmatpush1.msra.mxu0 %v84
    %293 = vmatprep.subr.mxu0 0.0
    %294 = vmatpush1.msra.mxu0 %v83
    %295 = vmatprep.subr.mxu0 0.0
    %296 = vmatpush1.msra.mxu0 %v82
    %297 = vmatprep.subr.mxu0 0.0
    %298 = vmatpush1.msra.mxu0 %v81
    %299 = vmatprep.subr.mxu0 0.0
    %300 = vmatpush1.msra.mxu0 %v80
    %301 = vmatprep.subr.mxu0 0.0
    %302 = vmatpush1.msra.mxu0 %v79
    %303 = vmatprep.subr.mxu0 0.0
    %304 = vmatpush1.msra.mxu0 %v78
    %305 = vmatprep.subr.mxu0 0.0
    %306 = vmatpush1.msra.mxu0 %v77
    %307 = vmatprep.subr.mxu0 0.0
    %308 = vmatpush1.msra.mxu0 %v76
    %309 = vmatprep.subr.mxu0 0.0
    %310 = vmatpush2.msra.mxu0 0.0
    %311 = vmatprep.subr.mxu0 0.0
    %312 = vmatpush2.msra.mxu0 0.0
    %313 = vmatprep.subr.mxu0 0.0
    %314 = vmatpush2.msra.mxu0 0.0
    %315 = vmatprep.subr.mxu0 0.0
    %316 = vmatpush2.msra.mxu0 0.0
    %317 = vmatprep.subr.mxu0 0.0
    %318 = vmatpush2.msra.mxu0 0.0
    %319 = vmatprep.subr.mxu0 0.0
    %320 = vmatpush2.msra.mxu0 0.0
    %321 = vmatprep.subr.mxu0 0.0
    %322 = vmatpush2.msra.mxu0 0.0
    %323 = vmatprep.subr.mxu0 0.0
    %324 = vmatpush2.msra.mxu0 0.0
    %325 = vmatprep.subr.mxu0 0.0
    %326 = vmatpush2.msra.mxu0 0.0
    %327 = vmatprep.subr.mxu0 0.0
    %328 = vmatpush2.msra.mxu0 0.0
    %329 = vmatprep.subr.mxu0 0.0
    %330 = vmatpush2.msra.mxu0 0.0
    %331 = vmatprep.subr.mxu0 0.0
    %332 = vmatpush2.msra.mxu0 0.0
    %333 = vmatprep.subr.mxu0 0.0
    %334 = vmatpush2.msra.mxu0 0.0
    %335 = vmatprep.subr.mxu0 0.0
    %336 = vmatpush2.msra.mxu0 0.0
    %337 = vmatprep.subr.mxu0 0.0
    %338 = vmatpush2.msra.mxu0 0.0
    %339 = vmatprep.subr.mxu0 0.0
    %340 = vmatpush2.msra.mxu0 0.0
    %341 = vmatprep.mubr.f32.mxu0 0.0
    %342 = vmatmul.mubr.f32.gmra.mxu0 %v270
    %v343 = vpop.f32.mrf.mxu0
    %v344 = vadd.f32 %v275, %v343
    %v345 = vpop.f32.mrf.mxu0
    %346 = vdwg.mxu0
    %v347 = vmul.f32 %v189, 31.62298
    %v348 = vmul.f32 %v344, 31.59195
    %v349 = vsub.f32 %v347, %v348
    %s350 = scalar_lea.vmem %s1, 14
    %v351 = vld [vmem:[%s350] sm:$0x3]
    %v352 = vmul.f32 %v351, 0.9806129
    %v353 = vadd.f32 %v349, %v352
    %v354 = vsel %vm188, %v93, %v353
    %v355 = vld [vmem:[%s3 + $0x6] sm:$0x1]
    %v356 = vlaneseq
    %v357 = vshrl.u32 %v356, 7
    %v358 = vsub.s32 0, %v357
    %v359 = vrot.slane %v355, %v358
    %360 = vmatprep.subr.mxu0 0.0
    %361 = vmatpush1.msra.mxu0 %v75
    %362 = vmatprep.subr.mxu0 0.0
    %363 = vmatpush1.msra.mxu0 %v74
    %364 = vmatprep.subr.mxu0 0.0
    %365 = vmatpush1.msra.mxu0 %v73
    %366 = vmatprep.subr.mxu0 0.0
    %367 = vmatpush1.msra.mxu0 %v72
    %368 = vmatprep.subr.mxu0 0.0
    %369 = vmatpush1.msra.mxu0 %v71
    %370 = vmatprep.subr.mxu0 0.0
    %371 = vmatpush1.msra.mxu0 %v70
    %372 = vmatprep.subr.mxu0 0.0
    %373 = vmatpush1.msra.mxu0 %v69
    %374 = vmatprep.subr.mxu0 0.0
    %375 = vmatpush1.msra.mxu0 %v68
    %376 = vmatprep.subr.mxu0 0.0
    %377 = vmatpush1.msra.mxu0 %v67
    %378 = vmatprep.subr.mxu0 0.0
    %379 = vmatpush1.msra.mxu0 %v66
    %380 = vmatprep.subr.mxu0 0.0
    %381 = vmatpush1.msra.mxu0 %v65
    %382 = vmatprep.subr.mxu0 0.0
    %383 = vmatpush1.msra.mxu0 %v64
    %384 = vmatprep.subr.mxu0 0.0
    %385 = vmatpush1.msra.mxu0 %v63
    %386 = vmatprep.subr.mxu0 0.0
    %387 = vmatpush1.msra.mxu0 %v62
    %388 = vmatprep.subr.mxu0 0.0
    %389 = vmatpush1.msra.mxu0 %v61
    %390 = vmatprep.subr.mxu0 0.0
    %391 = vmatpush1.msra.mxu0 %v60
    %392 = vmatprep.subr.mxu0 0.0
    %393 = vmatpush2.msra.mxu0 0.0
    %394 = vmatprep.subr.mxu0 0.0
    %395 = vmatpush2.msra.mxu0 0.0
    %396 = vmatprep.subr.mxu0 0.0
    %397 = vmatpush2.msra.mxu0 0.0
    %398 = vmatprep.subr.mxu0 0.0
    %399 = vmatpush2.msra.mxu0 0.0
    %400 = vmatprep.subr.mxu0 0.0
    %401 = vmatpush2.msra.mxu0 0.0
    %402 = vmatprep.subr.mxu0 0.0
    %403 = vmatpush2.msra.mxu0 0.0
    %404 = vmatprep.subr.mxu0 0.0
    %405 = vmatpush2.msra.mxu0 0.0
    %406 = vmatprep.subr.mxu0 0.0
    %407 = vmatpush2.msra.mxu0 0.0
    %408 = vmatprep.subr.mxu0 0.0
    %409 = vmatpush2.msra.mxu0 0.0
    %410 = vmatprep.subr.mxu0 0.0
    %411 = vmatpush2.msra.mxu0 0.0
    %412 = vmatprep.subr.mxu0 0.0
    %413 = vmatpush2.msra.mxu0 0.0
    %414 = vmatprep.subr.mxu0 0.0
    %415 = vmatpush2.msra.mxu0 0.0
    %416 = vmatprep.subr.mxu0 0.0
    %417 = vmatpush2.msra.mxu0 0.0
    %418 = vmatprep.subr.mxu0 0.0
    %419 = vmatpush2.msra.mxu0 0.0
    %420 = vmatprep.subr.mxu0 0.0
    %421 = vmatpush2.msra.mxu0 0.0
    %422 = vmatprep.subr.mxu0 0.0
    %423 = vmatpush2.msra.mxu0 0.0
    %424 = vmatprep.mubr.f32.mxu0 0.0
    %425 = vmatmul.mubr.f32.gmra.mxu0 %v354
    %v426 = vpop.f32.mrf.mxu0
    %v427 = vadd.f32 %v359, %v426
    %v428 = vpop.f32.mrf.mxu0
    %429 = vdwg.mxu0
    %v430 = vmax.f32 %v427, 0.0
    %v431 = vadd.f32 %v427, %v179
    %v432 = vmax.f32 %v431, 0.0
    %v433 = vmul.f32 %v430, -0.2
    %v434 = vmul.f32 %v432, 1.2
    %v435 = vadd.f32 %v433, %v434
    %436 = vmatprep.subr.mxu0 0.0
    %437 = vmatpush1.msra.mxu0 %v91
    %438 = vmatprep.subr.mxu0 0.0
    %439 = vmatpush1.msra.mxu0 %v90
    %440 = vmatprep.subr.mxu0 0.0
    %441 = vmatpush1.msra.mxu0 %v89
    %442 = vmatprep.subr.mxu0 0.0
    %443 = vmatpush1.msra.mxu0 %v88
    %444 = vmatprep.subr.mxu0 0.0
    %445 = vmatpush1.msra.mxu0 %v87
    %446 = vmatprep.subr.mxu0 0.0
    %447 = vmatpush1.msra.mxu0 %v86
    %448 = vmatprep.subr.mxu0 0.0
    %449 = vmatpush1.msra.mxu0 %v85
    %450 = vmatprep.subr.mxu0 0.0
    %451 = vmatpush1.msra.mxu0 %v84
    %452 = vmatprep.subr.mxu0 0.0
    %453 = vmatpush1.msra.mxu0 %v83
    %454 = vmatprep.subr.mxu0 0.0
    %455 = vmatpush1.msra.mxu0 %v82
    %456 = vmatprep.subr.mxu0 0.0
    %457 = vmatpush1.msra.mxu0 %v81
    %458 = vmatprep.subr.mxu0 0.0
    %459 = vmatpush1.msra.mxu0 %v80
    %460 = vmatprep.subr.mxu0 0.0
    %461 = vmatpush1.msra.mxu0 %v79
    %462 = vmatprep.subr.mxu0 0.0
    %463 = vmatpush1.msra.mxu0 %v78
    %464 = vmatprep.subr.mxu0 0.0
    %465 = vmatpush1.msra.mxu0 %v77
    %466 = vmatprep.subr.mxu0 0.0
    %467 = vmatpush1.msra.mxu0 %v76
    %468 = vmatprep.subr.mxu0 0.0
    %469 = vmatpush2.msra.mxu0 0.0
    %470 = vmatprep.subr.mxu0 0.0
    %471 = vmatpush2.msra.mxu0 0.0
    %472 = vmatprep.subr.mxu0 0.0
    %473 = vmatpush2.msra.mxu0 0.0
    %474 = vmatprep.subr.mxu0 0.0
    %475 = vmatpush2.msra.mxu0 0.0
    %476 = vmatprep.subr.mxu0 0.0
    %477 = vmatpush2.msra.mxu0 0.0
    %478 = vmatprep.subr.mxu0 0.0
    %479 = vmatpush2.msra.mxu0 0.0
    %480 = vmatprep.subr.mxu0 0.0
    %481 = vmatpush2.msra.mxu0 0.0
    %482 = vmatprep.subr.mxu0 0.0
    %483 = vmatpush2.msra.mxu0 0.0
    %484 = vmatprep.subr.mxu0 0.0
    %485 = vmatpush2.msra.mxu0 0.0
    %486 = vmatprep.subr.mxu0 0.0
    %487 = vmatpush2.msra.mxu0 0.0
    %488 = vmatprep.subr.mxu0 0.0
    %489 = vmatpush2.msra.mxu0 0.0
    %490 = vmatprep.subr.mxu0 0.0
    %491 = vmatpush2.msra.mxu0 0.0
    %492 = vmatprep.subr.mxu0 0.0
    %493 = vmatpush2.msra.mxu0 0.0
    %494 = vmatprep.subr.mxu0 0.0
    %495 = vmatpush2.msra.mxu0 0.0
    %496 = vmatprep.subr.mxu0 0.0
    %497 = vmatpush2.msra.mxu0 0.0
    %498 = vmatprep.subr.mxu0 0.0
    %499 = vmatpush2.msra.mxu0 0.0
    %500 = vmatprep.mubr.f32.mxu0 0.0
    %501 = vmatmul.mubr.f32.gmra.mxu0 %v435
    %v502 = vpop.f32.mrf.mxu0
    %v503 = vadd.f32 %v275, %v502
    %v504 = vpop.f32.mrf.mxu0
    %505 = vdwg.mxu0
    %v506 = vmul.f32 %v354, 1.9621762
    %v507 = vmul.f32 %v503, 1.4805423
    %v508 = vsub.f32 %v506, %v507
    %s509 = scalar_lea.vmem %s1, 12
    %v510 = vld [vmem:[%s509] sm:$0x3]
    %v511 = vmul.f32 %v510, 0.81125224
    %v512 = vadd.f32 %v508, %v511
    %v513 = vsel %vm188, %v93, %v512
    %v514 = vld [vmem:[%s3 + $0x5] sm:$0x1]
    %v515 = vlaneseq
    %v516 = vshrl.u32 %v515, 7
    %v517 = vsub.s32 0, %v516
    %v518 = vrot.slane %v514, %v517
    %519 = vmatprep.subr.mxu0 0.0
    %520 = vmatpush1.msra.mxu0 %v75
    %521 = vmatprep.subr.mxu0 0.0
    %522 = vmatpush1.msra.mxu0 %v74
    %523 = vmatprep.subr.mxu0 0.0
    %524 = vmatpush1.msra.mxu0 %v73
    %525 = vmatprep.subr.mxu0 0.0
    %526 = vmatpush1.msra.mxu0 %v72
    %527 = vmatprep.subr.mxu0 0.0
    %528 = vmatpush1.msra.mxu0 %v71
    %529 = vmatprep.subr.mxu0 0.0
    %530 = vmatpush1.msra.mxu0 %v70
    %531 = vmatprep.subr.mxu0 0.0
    %532 = vmatpush1.msra.mxu0 %v69
    %533 = vmatprep.subr.mxu0 0.0
    %534 = vmatpush1.msra.mxu0 %v68
    %535 = vmatprep.subr.mxu0 0.0
    %536 = vmatpush1.msra.mxu0 %v67
    %537 = vmatprep.subr.mxu0 0.0
    %538 = vmatpush1.msra.mxu0 %v66
    %539 = vmatprep.subr.mxu0 0.0
    %540 = vmatpush1.msra.mxu0 %v65
    %541 = vmatprep.subr.mxu0 0.0
    %542 = vmatpush1.msra.mxu0 %v64
    %543 = vmatprep.subr.mxu0 0.0
    %544 = vmatpush1.msra.mxu0 %v63
    %545 = vmatprep.subr.mxu0 0.0
    %546 = vmatpush1.msra.mxu0 %v62
    %547 = vmatprep.subr.mxu0 0.0
    %548 = vmatpush1.msra.mxu0 %v61
    %549 = vmatprep.subr.mxu0 0.0
    %550 = vmatpush1.msra.mxu0 %v60
    %551 = vmatprep.subr.mxu0 0.0
    %552 = vmatpush2.msra.mxu0 0.0
    %553 = vmatprep.subr.mxu0 0.0
    %554 = vmatpush2.msra.mxu0 0.0
    %555 = vmatprep.subr.mxu0 0.0
    %556 = vmatpush2.msra.mxu0 0.0
    %557 = vmatprep.subr.mxu0 0.0
    %558 = vmatpush2.msra.mxu0 0.0
    %559 = vmatprep.subr.mxu0 0.0
    %560 = vmatpush2.msra.mxu0 0.0
    %561 = vmatprep.subr.mxu0 0.0
    %562 = vmatpush2.msra.mxu0 0.0
    %563 = vmatprep.subr.mxu0 0.0
    %564 = vmatpush2.msra.mxu0 0.0
    %565 = vmatprep.subr.mxu0 0.0
    %566 = vmatpush2.msra.mxu0 0.0
    %567 = vmatprep.subr.mxu0 0.0
    %568 = vmatpush2.msra.mxu0 0.0
    %569 = vmatprep.subr.mxu0 0.0
    %570 = vmatpush2.msra.mxu0 0.0
    %571 = vmatprep.subr.mxu0 0.0
    %572 = vmatpush2.msra.mxu0 0.0
    %573 = vmatprep.subr.mxu0 0.0
    %574 = vmatpush2.msra.mxu0 0.0
    %575 = vmatprep.subr.mxu0 0.0
    %576 = vmatpush2.msra.mxu0 0.0
    %577 = vmatprep.subr.mxu0 0.0
    %578 = vmatpush2.msra.mxu0 0.0
    %579 = vmatprep.subr.mxu0 0.0
    %580 = vmatpush2.msra.mxu0 0.0
    %581 = vmatprep.subr.mxu0 0.0
    %582 = vmatpush2.msra.mxu0 0.0
    %583 = vmatprep.mubr.f32.mxu0 0.0
    %584 = vmatmul.mubr.f32.gmra.mxu0 %v513
    %v585 = vpop.f32.mrf.mxu0
    %v586 = vadd.f32 %v518, %v585
    %v587 = vpop.f32.mrf.mxu0
    %588 = vdwg.mxu0
    %v589 = vmax.f32 %v586, 0.0
    %v590 = vadd.f32 %v586, %v179
    %v591 = vmax.f32 %v590, 0.0
    %v592 = vmul.f32 %v589, -0.2
    %v593 = vmul.f32 %v591, 1.2
    %v594 = vadd.f32 %v592, %v593
    %595 = vmatprep.subr.mxu0 0.0
    %596 = vmatpush1.msra.mxu0 %v91
    %597 = vmatprep.subr.mxu0 0.0
    %598 = vmatpush1.msra.mxu0 %v90
    %599 = vmatprep.subr.mxu0 0.0
    %600 = vmatpush1.msra.mxu0 %v89
    %601 = vmatprep.subr.mxu0 0.0
    %602 = vmatpush1.msra.mxu0 %v88
    %603 = vmatprep.subr.mxu0 0.0
    %604 = vmatpush1.msra.mxu0 %v87
    %605 = vmatprep.subr.mxu0 0.0
    %606 = vmatpush1.msra.mxu0 %v86
    %607 = vmatprep.subr.mxu0 0.0
    %608 = vmatpush1.msra.mxu0 %v85
    %609 = vmatprep.subr.mxu0 0.0
    %610 = vmatpush1.msra.mxu0 %v84
    %611 = vmatprep.subr.mxu0 0.0
    %612 = vmatpush1.msra.mxu0 %v83
    %613 = vmatprep.subr.mxu0 0.0
    %614 = vmatpush1.msra.mxu0 %v82
    %615 = vmatprep.subr.mxu0 0.0
    %616 = vmatpush1.msra.mxu0 %v81
    %617 = vmatprep.subr.mxu0 0.0
    %618 = vmatpush1.msra.mxu0 %v80
    %619 = vmatprep.subr.mxu0 0.0
    %620 = vmatpush1.msra.mxu0 %v79
    %621 = vmatprep.subr.mxu0 0.0
    %622 = vmatpush1.msra.mxu0 %v78
    %623 = vmatprep.subr.mxu0 0.0
    %624 = vmatpush1.msra.mxu0 %v77
    %625 = vmatprep.subr.mxu0 0.0
    %626 = vmatpush1.msra.mxu0 %v76
    %627 = vmatprep.subr.mxu0 0.0
    %628 = vmatpush2.msra.mxu0 0.0
    %629 = vmatprep.subr.mxu0 0.0
    %630 = vmatpush2.msra.mxu0 0.0
    %631 = vmatprep.subr.mxu0 0.0
    %632 = vmatpush2.msra.mxu0 0.0
    %633 = vmatprep.subr.mxu0 0.0
    %634 = vmatpush2.msra.mxu0 0.0
    %635 = vmatprep.subr.mxu0 0.0
    %636 = vmatpush2.msra.mxu0 0.0
    %637 = vmatprep.subr.mxu0 0.0
    %638 = vmatpush2.msra.mxu0 0.0
    %639 = vmatprep.subr.mxu0 0.0
    %640 = vmatpush2.msra.mxu0 0.0
    %641 = vmatprep.subr.mxu0 0.0
    %642 = vmatpush2.msra.mxu0 0.0
    %643 = vmatprep.subr.mxu0 0.0
    %644 = vmatpush2.msra.mxu0 0.0
    %645 = vmatprep.subr.mxu0 0.0
    %646 = vmatpush2.msra.mxu0 0.0
    %647 = vmatprep.subr.mxu0 0.0
    %648 = vmatpush2.msra.mxu0 0.0
    %649 = vmatprep.subr.mxu0 0.0
    %650 = vmatpush2.msra.mxu0 0.0
    %651 = vmatprep.subr.mxu0 0.0
    %652 = vmatpush2.msra.mxu0 0.0
    %653 = vmatprep.subr.mxu0 0.0
    %654 = vmatpush2.msra.mxu0 0.0
    %655 = vmatprep.subr.mxu0 0.0
    %656 = vmatpush2.msra.mxu0 0.0
    %657 = vmatprep.subr.mxu0 0.0
    %658 = vmatpush2.msra.mxu0 0.0
    %659 = vmatprep.mubr.f32.mxu0 0.0
    %660 = vmatmul.mubr.f32.gmra.mxu0 %v594
    %v661 = vpop.f32.mrf.mxu0
    %v662 = vadd.f32 %v275, %v661
    %v663 = vpop.f32.mrf.mxu0
    %664 = vdwg.mxu0
    %v665 = vmul.f32 %v513, 1.452538
    %v666 = vmul.f32 %v662, 0.8259912
    %v667 = vsub.f32 %v665, %v666
    %s668 = scalar_lea.vmem %s1, 10
    %v669 = vld [vmem:[%s668] sm:$0x3]
    %v670 = vmul.f32 %v669, 0.65391517
    %v671 = vadd.f32 %v667, %v670
    %v672 = vsel %vm188, %v93, %v671
    %v673 = vld [vmem:[%s3 + $0x4] sm:$0x1]
    %v674 = vlaneseq
    %v675 = vshrl.u32 %v674, 7
    %v676 = vsub.s32 0, %v675
    %v677 = vrot.slane %v673, %v676
    %678 = vmatprep.subr.mxu0 0.0
    %679 = vmatpush1.msra.mxu0 %v75
    %680 = vmatprep.subr.mxu0 0.0
    %681 = vmatpush1.msra.mxu0 %v74
    %682 = vmatprep.subr.mxu0 0.0
    %683 = vmatpush1.msra.mxu0 %v73
    %684 = vmatprep.subr.mxu0 0.0
    %685 = vmatpush1.msra.mxu0 %v72
    %686 = vmatprep.subr.mxu0 0.0
    %687 = vmatpush1.msra.mxu0 %v71
    %688 = vmatprep.subr.mxu0 0.0
    %689 = vmatpush1.msra.mxu0 %v70
    %690 = vmatprep.subr.mxu0 0.0
    %691 = vmatpush1.msra.mxu0 %v69
    %692 = vmatprep.subr.mxu0 0.0
    %693 = vmatpush1.msra.mxu0 %v68
    %694 = vmatprep.subr.mxu0 0.0
    %695 = vmatpush1.msra.mxu0 %v67
    %696 = vmatprep.subr.mxu0 0.0
    %697 = vmatpush1.msra.mxu0 %v66
    %698 = vmatprep.subr.mxu0 0.0
    %699 = vmatpush1.msra.mxu0 %v65
    %700 = vmatprep.subr.mxu0 0.0
    %701 = vmatpush1.msra.mxu0 %v64
    %702 = vmatprep.subr.mxu0 0.0
    %703 = vmatpush1.msra.mxu0 %v63
    %704 = vmatprep.subr.mxu0 0.0
    %705 = vmatpush1.msra.mxu0 %v62
    %706 = vmatprep.subr.mxu0 0.0
    %707 = vmatpush1.msra.mxu0 %v61
    %708 = vmatprep.subr.mxu0 0.0
    %709 = vmatpush1.msra.mxu0 %v60
    %710 = vmatprep.subr.mxu0 0.0
    %711 = vmatpush2.msra.mxu0 0.0
    %712 = vmatprep.subr.mxu0 0.0
    %713 = vmatpush2.msra.mxu0 0.0
    %714 = vmatprep.subr.mxu0 0.0
    %715 = vmatpush2.msra.mxu0 0.0
    %716 = vmatprep.subr.mxu0 0.0
    %717 = vmatpush2.msra.mxu0 0.0
    %718 = vmatprep.subr.mxu0 0.0
    %719 = vmatpush2.msra.mxu0 0.0
    %720 = vmatprep.subr.mxu0 0.0
    %721 = vmatpush2.msra.mxu0 0.0
    %722 = vmatprep.subr.mxu0 0.0
    %723 = vmatpush2.msra.mxu0 0.0
    %724 = vmatprep.subr.mxu0 0.0
    %725 = vmatpush2.msra.mxu0 0.0
    %726 = vmatprep.subr.mxu0 0.0
    %727 = vmatpush2.msra.mxu0 0.0
    %728 = vmatprep.subr.mxu0 0.0
    %729 = vmatpush2.msra.mxu0 0.0
    %730 = vmatprep.subr.mxu0 0.0
    %731 = vmatpush2.msra.mxu0 0.0
    %732 = vmatprep.subr.mxu0 0.0
    %733 = vmatpush2.msra.mxu0 0.0
    %734 = vmatprep.subr.mxu0 0.0
    %735 = vmatpush2.msra.mxu0 0.0
    %736 = vmatprep.subr.mxu0 0.0
    %737 = vmatpush2.msra.mxu0 0.0
    %738 = vmatprep.subr.mxu0 0.0
    %739 = vmatpush2.msra.mxu0 0.0
    %740 = vmatprep.subr.mxu0 0.0
    %741 = vmatpush2.msra.mxu0 0.0
    %742 = vmatprep.mubr.f32.mxu0 0.0
    %743 = vmatmul.mubr.f32.gmra.mxu0 %v672
    %v744 = vpop.f32.mrf.mxu0
    %v745 = vadd.f32 %v677, %v744
    %v746 = vpop.f32.mrf.mxu0
    %747 = vdwg.mxu0
    %v748 = vmax.f32 %v745, 0.0
    %v749 = vadd.f32 %v745, %v179
    %v750 = vmax.f32 %v749, 0.0
    %v751 = vmul.f32 %v748, -0.2
    %v752 = vmul.f32 %v750, 1.2
    %v753 = vadd.f32 %v751, %v752
    %754 = vmatprep.subr.mxu0 0.0
    %755 = vmatpush1.msra.mxu0 %v91
    %756 = vmatprep.subr.mxu0 0.0
    %757 = vmatpush1.msra.mxu0 %v90
    %758 = vmatprep.subr.mxu0 0.0
    %759 = vmatpush1.msra.mxu0 %v89
    %760 = vmatprep.subr.mxu0 0.0
    %761 = vmatpush1.msra.mxu0 %v88
    %762 = vmatprep.subr.mxu0 0.0
    %763 = vmatpush1.msra.mxu0 %v87
    %764 = vmatprep.subr.mxu0 0.0
    %765 = vmatpush1.msra.mxu0 %v86
    %766 = vmatprep.subr.mxu0 0.0
    %767 = vmatpush1.msra.mxu0 %v85
    %768 = vmatprep.subr.mxu0 0.0
    %769 = vmatpush1.msra.mxu0 %v84
    %770 = vmatprep.subr.mxu0 0.0
    %771 = vmatpush1.msra.mxu0 %v83
    %772 = vmatprep.subr.mxu0 0.0
    %773 = vmatpush1.msra.mxu0 %v82
    %774 = vmatprep.subr.mxu0 0.0
    %775 = vmatpush1.msra.mxu0 %v81
    %776 = vmatprep.subr.mxu0 0.0
    %777 = vmatpush1.msra.mxu0 %v80
    %778 = vmatprep.subr.mxu0 0.0
    %779 = vmatpush1.msra.mxu0 %v79
    %780 = vmatprep.subr.mxu0 0.0
    %781 = vmatpush1.msra.mxu0 %v78
    %782 = vmatprep.subr.mxu0 0.0
    %783 = vmatpush1.msra.mxu0 %v77
    %784 = vmatprep.subr.mxu0 0.0
    %785 = vmatpush1.msra.mxu0 %v76
    %786 = vmatprep.subr.mxu0 0.0
    %787 = vmatpush2.msra.mxu0 0.0
    %788 = vmatprep.subr.mxu0 0.0
    %789 = vmatpush2.msra.mxu0 0.0
    %790 = vmatprep.subr.mxu0 0.0
    %791 = vmatpush2.msra.mxu0 0.0
    %792 = vmatprep.subr.mxu0 0.0
    %793 = vmatpush2.msra.mxu0 0.0
    %794 = vmatprep.subr.mxu0 0.0
    %795 = vmatpush2.msra.mxu0 0.0
    %796 = vmatprep.subr.mxu0 0.0
    %797 = vmatpush2.msra.mxu0 0.0
    %798 = vmatprep.subr.mxu0 0.0
    %799 = vmatpush2.msra.mxu0 0.0
    %800 = vmatprep.subr.mxu0 0.0
    %801 = vmatpush2.msra.mxu0 0.0
    %802 = vmatprep.subr.mxu0 0.0
    %803 = vmatpush2.msra.mxu0 0.0
    %804 = vmatprep.subr.mxu0 0.0
    %805 = vmatpush2.msra.mxu0 0.0
    %806 = vmatprep.subr.mxu0 0.0
    %807 = vmatpush2.msra.mxu0 0.0
    %808 = vmatprep.subr.mxu0 0.0
    %809 = vmatpush2.msra.mxu0 0.0
    %810 = vmatprep.subr.mxu0 0.0
    %811 = vmatpush2.msra.mxu0 0.0
    %812 = vmatprep.subr.mxu0 0.0
    %813 = vmatpush2.msra.mxu0 0.0
    %814 = vmatprep.subr.mxu0 0.0
    %815 = vmatpush2.msra.mxu0 0.0
    %816 = vmatprep.subr.mxu0 0.0
    %817 = vmatpush2.msra.mxu0 0.0
    %818 = vmatprep.mubr.f32.mxu0 0.0
    %819 = vmatmul.mubr.f32.gmra.mxu0 %v753
    %v820 = vpop.f32.mrf.mxu0
    %v821 = vadd.f32 %v275, %v820
    %v822 = vpop.f32.mrf.mxu0
    %823 = vdwg.mxu0
    %v824 = vmul.f32 %v672, 1.2737261
    %v825 = vmul.f32 %v821, 0.58586407
    %v826 = vsub.f32 %v824, %v825
    %s827 = scalar_lea.vmem %s1, 8
    %v828 = vld [vmem:[%s827] sm:$0x3]
    %v829 = vmul.f32 %v828, 0.5283383
    %v830 = vadd.f32 %v826, %v829
    %v831 = vsel %vm188, %v93, %v830
    %v832 = vld [vmem:[%s3 + $0x3] sm:$0x1]
    %v833 = vlaneseq
    %v834 = vshrl.u32 %v833, 7
    %v835 = vsub.s32 0, %v834
    %v836 = vrot.slane %v832, %v835
    %837 = vmatprep.subr.mxu0 0.0
    %838 = vmatpush1.msra.mxu0 %v75
    %839 = vmatprep.subr.mxu0 0.0
    %840 = vmatpush1.msra.mxu0 %v74
    %841 = vmatprep.subr.mxu0 0.0
    %842 = vmatpush1.msra.mxu0 %v73
    %843 = vmatprep.subr.mxu0 0.0
    %844 = vmatpush1.msra.mxu0 %v72
    %845 = vmatprep.subr.mxu0 0.0
    %846 = vmatpush1.msra.mxu0 %v71
    %847 = vmatprep.subr.mxu0 0.0
    %848 = vmatpush1.msra.mxu0 %v70
    %849 = vmatprep.subr.mxu0 0.0
    %850 = vmatpush1.msra.mxu0 %v69
    %851 = vmatprep.subr.mxu0 0.0
    %852 = vmatpush1.msra.mxu0 %v68
    %853 = vmatprep.subr.mxu0 0.0
    %854 = vmatpush1.msra.mxu0 %v67
    %855 = vmatprep.subr.mxu0 0.0
    %856 = vmatpush1.msra.mxu0 %v66
    %857 = vmatprep.subr.mxu0 0.0
    %858 = vmatpush1.msra.mxu0 %v65
    %859 = vmatprep.subr.mxu0 0.0
    %860 = vmatpush1.msra.mxu0 %v64
    %861 = vmatprep.subr.mxu0 0.0
    %862 = vmatpush1.msra.mxu0 %v63
    %863 = vmatprep.subr.mxu0 0.0
    %864 = vmatpush1.msra.mxu0 %v62
    %865 = vmatprep.subr.mxu0 0.0
    %866 = vmatpush1.msra.mxu0 %v61
    %867 = vmatprep.subr.mxu0 0.0
    %868 = vmatpush1.msra.mxu0 %v60
    %869 = vmatprep.subr.mxu0 0.0
    %870 = vmatpush2.msra.mxu0 0.0
    %871 = vmatprep.subr.mxu0 0.0
    %872 = vmatpush2.msra.mxu0 0.0
    %873 = vmatprep.subr.mxu0 0.0
    %874 = vmatpush2.msra.mxu0 0.0
    %875 = vmatprep.subr.mxu0 0.0
    %876 = vmatpush2.msra.mxu0 0.0
    %877 = vmatprep.subr.mxu0 0.0
    %878 = vmatpush2.msra.mxu0 0.0
    %879 = vmatprep.subr.mxu0 0.0
    %880 = vmatpush2.msra.mxu0 0.0
    %881 = vmatprep.subr.mxu0 0.0
    %882 = vmatpush2.msra.mxu0 0.0
    %883 = vmatprep.subr.mxu0 0.0
    %884 = vmatpush2.msra.mxu0 0.0
    %885 = vmatprep.subr.mxu0 0.0
    %886 = vmatpush2.msra.mxu0 0.0
    %887 = vmatprep.subr.mxu0 0.0
    %888 = vmatpush2.msra.mxu0 0.0
    %889 = vmatprep.subr.mxu0 0.0
    %890 = vmatpush2.msra.mxu0 0.0
    %891 = vmatprep.subr.mxu0 0.0
    %892 = vmatpush2.msra.mxu0 0.0
    %893 = vmatprep.subr.mxu0 0.0
    %894 = vmatpush2.msra.mxu0 0.0
    %895 = vmatprep.subr.mxu0 0.0
    %896 = vmatpush2.msra.mxu0 0.0
    %897 = vmatprep.subr.mxu0 0.0
    %898 = vmatpush2.msra.mxu0 0.0
    %899 = vmatprep.subr.mxu0 0.0
    %900 = vmatpush2.msra.mxu0 0.0
    %901 = vmatprep.mubr.f32.mxu0 0.0
    %902 = vmatmul.mubr.f32.gmra.mxu0 %v831
    %v903 = vpop.f32.mrf.mxu0
    %v904 = vadd.f32 %v836, %v903
    %v905 = vpop.f32.mrf.mxu0
    %906 = vdwg.mxu0
    %v907 = vmax.f32 %v904, 0.0
    %v908 = vadd.f32 %v904, %v179
    %v909 = vmax.f32 %v908, 0.0
    %v910 = vmul.f32 %v907, -0.2
    %v911 = vmul.f32 %v909, 1.2
    %v912 = vadd.f32 %v910, %v911
    %913 = vmatprep.subr.mxu0 0.0
    %914 = vmatpush1.msra.mxu0 %v91
    %915 = vmatprep.subr.mxu0 0.0
    %916 = vmatpush1.msra.mxu0 %v90
    %917 = vmatprep.subr.mxu0 0.0
    %918 = vmatpush1.msra.mxu0 %v89
    %919 = vmatprep.subr.mxu0 0.0
    %920 = vmatpush1.msra.mxu0 %v88
    %921 = vmatprep.subr.mxu0 0.0
    %922 = vmatpush1.msra.mxu0 %v87
    %923 = vmatprep.subr.mxu0 0.0
    %924 = vmatpush1.msra.mxu0 %v86
    %925 = vmatprep.subr.mxu0 0.0
    %926 = vmatpush1.msra.mxu0 %v85
    %927 = vmatprep.subr.mxu0 0.0
    %928 = vmatpush1.msra.mxu0 %v84
    %929 = vmatprep.subr.mxu0 0.0
    %930 = vmatpush1.msra.mxu0 %v83
    %931 = vmatprep.subr.mxu0 0.0
    %932 = vmatpush1.msra.mxu0 %v82
    %933 = vmatprep.subr.mxu0 0.0
    %934 = vmatpush1.msra.mxu0 %v81
    %935 = vmatprep.subr.mxu0 0.0
    %936 = vmatpush1.msra.mxu0 %v80
    %937 = vmatprep.subr.mxu0 0.0
    %938 = vmatpush1.msra.mxu0 %v79
    %939 = vmatprep.subr.mxu0 0.0
    %940 = vmatpush1.msra.mxu0 %v78
    %941 = vmatprep.subr.mxu0 0.0
    %942 = vmatpush1.msra.mxu0 %v77
    %943 = vmatprep.subr.mxu0 0.0
    %944 = vmatpush1.msra.mxu0 %v76
    %945 = vmatprep.subr.mxu0 0.0
    %946 = vmatpush2.msra.mxu0 0.0
    %947 = vmatprep.subr.mxu0 0.0
    %948 = vmatpush2.msra.mxu0 0.0
    %949 = vmatprep.subr.mxu0 0.0
    %950 = vmatpush2.msra.mxu0 0.0
    %951 = vmatprep.subr.mxu0 0.0
    %952 = vmatpush2.msra.mxu0 0.0
    %953 = vmatprep.subr.mxu0 0.0
    %954 = vmatpush2.msra.mxu0 0.0
    %955 = vmatprep.subr.mxu0 0.0
    %956 = vmatpush2.msra.mxu0 0.0
    %957 = vmatprep.subr.mxu0 0.0
    %958 = vmatpush2.msra.mxu0 0.0
    %959 = vmatprep.subr.mxu0 0.0
    %960 = vmatpush2.msra.mxu0 0.0
    %961 = vmatprep.subr.mxu0 0.0
    %962 = vmatpush2.msra.mxu0 0.0
    %963 = vmatprep.subr.mxu0 0.0
    %964 = vmatpush2.msra.mxu0 0.0
    %965 = vmatprep.subr.mxu0 0.0
    %966 = vmatpush2.msra.mxu0 0.0
    %967 = vmatprep.subr.mxu0 0.0
    %968 = vmatpush2.msra.mxu0 0.0
    %969 = vmatprep.subr.mxu0 0.0
    %970 = vmatpush2.msra.mxu0 0.0
    %971 = vmatprep.subr.mxu0 0.0
    %972 = vmatpush2.msra.mxu0 0.0
    %973 = vmatprep.subr.mxu0 0.0
    %974 = vmatpush2.msra.mxu0 0.0
    %975 = vmatprep.subr.mxu0 0.0
    %976 = vmatpush2.msra.mxu0 0.0
    %977 = vmatprep.mubr.f32.mxu0 0.0
    %978 = vmatmul.mubr.f32.gmra.mxu0 %v912
    %v979 = vpop.f32.mrf.mxu0
    %v980 = vadd.f32 %v275, %v979
    %v981 = vpop.f32.mrf.mxu0
    %982 = vdwg.mxu0
    %v983 = vmul.f32 %v831, 1.177078
    %v984 = vmul.f32 %v980, 0.46035308
    %v985 = vsub.f32 %v983, %v984
    %s986 = scalar_lea.vmem %s1, 6
    %v987 = vld [vmem:[%s986] sm:$0x3]
    %v988 = vmul.f32 %v987, 0.4166386
    %v989 = vadd.f32 %v985, %v988
    %v990 = vsel %vm188, %v93, %v989
    %v991 = vld [vmem:[%s3 + $0x2] sm:$0x1]
    %v992 = vlaneseq
    %v993 = vshrl.u32 %v992, 7
    %v994 = vsub.s32 0, %v993
    %v995 = vrot.slane %v991, %v994
    %996 = vmatprep.subr.mxu0 0.0
    %997 = vmatpush1.msra.mxu0 %v75
    %998 = vmatprep.subr.mxu0 0.0
    %999 = vmatpush1.msra.mxu0 %v74
    %1000 = vmatprep.subr.mxu0 0.0
    %1001 = vmatpush1.msra.mxu0 %v73
    %1002 = vmatprep.subr.mxu0 0.0
    %1003 = vmatpush1.msra.mxu0 %v72
    %1004 = vmatprep.subr.mxu0 0.0
    %1005 = vmatpush1.msra.mxu0 %v71
    %1006 = vmatprep.subr.mxu0 0.0
    %1007 = vmatpush1.msra.mxu0 %v70
    %1008 = vmatprep.subr.mxu0 0.0
    %1009 = vmatpush1.msra.mxu0 %v69
    %1010 = vmatprep.subr.mxu0 0.0
    %1011 = vmatpush1.msra.mxu0 %v68
    %1012 = vmatprep.subr.mxu0 0.0
    %1013 = vmatpush1.msra.mxu0 %v67
    %1014 = vmatprep.subr.mxu0 0.0
    %1015 = vmatpush1.msra.mxu0 %v66
    %1016 = vmatprep.subr.mxu0 0.0
    %1017 = vmatpush1.msra.mxu0 %v65
    %1018 = vmatprep.subr.mxu0 0.0
    %1019 = vmatpush1.msra.mxu0 %v64
    %1020 = vmatprep.subr.mxu0 0.0
    %1021 = vmatpush1.msra.mxu0 %v63
    %1022 = vmatprep.subr.mxu0 0.0
    %1023 = vmatpush1.msra.mxu0 %v62
    %1024 = vmatprep.subr.mxu0 0.0
    %1025 = vmatpush1.msra.mxu0 %v61
    %1026 = vmatprep.subr.mxu0 0.0
    %1027 = vmatpush1.msra.mxu0 %v60
    %1028 = vmatprep.subr.mxu0 0.0
    %1029 = vmatpush2.msra.mxu0 0.0
    %1030 = vmatprep.subr.mxu0 0.0
    %1031 = vmatpush2.msra.mxu0 0.0
    %1032 = vmatprep.subr.mxu0 0.0
    %1033 = vmatpush2.msra.mxu0 0.0
    %1034 = vmatprep.subr.mxu0 0.0
    %1035 = vmatpush2.msra.mxu0 0.0
    %1036 = vmatprep.subr.mxu0 0.0
    %1037 = vmatpush2.msra.mxu0 0.0
    %1038 = vmatprep.subr.mxu0 0.0
    %1039 = vmatpush2.msra.mxu0 0.0
    %1040 = vmatprep.subr.mxu0 0.0
    %1041 = vmatpush2.msra.mxu0 0.0
    %1042 = vmatprep.subr.mxu0 0.0
    %1043 = vmatpush2.msra.mxu0 0.0
    %1044 = vmatprep.subr.mxu0 0.0
    %1045 = vmatpush2.msra.mxu0 0.0
    %1046 = vmatprep.subr.mxu0 0.0
    %1047 = vmatpush2.msra.mxu0 0.0
    %1048 = vmatprep.subr.mxu0 0.0
    %1049 = vmatpush2.msra.mxu0 0.0
    %1050 = vmatprep.subr.mxu0 0.0
    %1051 = vmatpush2.msra.mxu0 0.0
    %1052 = vmatprep.subr.mxu0 0.0
    %1053 = vmatpush2.msra.mxu0 0.0
    %1054 = vmatprep.subr.mxu0 0.0
    %1055 = vmatpush2.msra.mxu0 0.0
    %1056 = vmatprep.subr.mxu0 0.0
    %1057 = vmatpush2.msra.mxu0 0.0
    %1058 = vmatprep.subr.mxu0 0.0
    %1059 = vmatpush2.msra.mxu0 0.0
    %1060 = vmatprep.mubr.f32.mxu0 0.0
    %1061 = vmatmul.mubr.f32.gmra.mxu0 %v990
    %v1062 = vpop.f32.mrf.mxu0
    %v1063 = vadd.f32 %v995, %v1062
    %v1064 = vpop.f32.mrf.mxu0
    %1065 = vdwg.mxu0
    %v1066 = vmax.f32 %v1063, 0.0
    %v1067 = vadd.f32 %v1063, %v179
    %v1068 = vmax.f32 %v1067, 0.0
    %v1069 = vmul.f32 %v1066, -0.2
    %v1070 = vmul.f32 %v1068, 1.2
    %v1071 = vadd.f32 %v1069, %v1070
    %1072 = vmatprep.subr.mxu0 0.0
    %1073 = vmatpush1.msra.mxu0 %v91
    %1074 = vmatprep.subr.mxu0 0.0
    %1075 = vmatpush1.msra.mxu0 %v90
    %1076 = vmatprep.subr.mxu0 0.0
    %1077 = vmatpush1.msra.mxu0 %v89
    %1078 = vmatprep.subr.mxu0 0.0
    %1079 = vmatpush1.msra.mxu0 %v88
    %1080 = vmatprep.subr.mxu0 0.0
    %1081 = vmatpush1.msra.mxu0 %v87
    %1082 = vmatprep.subr.mxu0 0.0
    %1083 = vmatpush1.msra.mxu0 %v86
    %1084 = vmatprep.subr.mxu0 0.0
    %1085 = vmatpush1.msra.mxu0 %v85
    %1086 = vmatprep.subr.mxu0 0.0
    %1087 = vmatpush1.msra.mxu0 %v84
    %1088 = vmatprep.subr.mxu0 0.0
    %1089 = vmatpush1.msra.mxu0 %v83
    %1090 = vmatprep.subr.mxu0 0.0
    %1091 = vmatpush1.msra.mxu0 %v82
    %1092 = vmatprep.subr.mxu0 0.0
    %1093 = vmatpush1.msra.mxu0 %v81
    %1094 = vmatprep.subr.mxu0 0.0
    %1095 = vmatpush1.msra.mxu0 %v80
    %1096 = vmatprep.subr.mxu0 0.0
    %1097 = vmatpush1.msra.mxu0 %v79
    %1098 = vmatprep.subr.mxu0 0.0
    %1099 = vmatpush1.msra.mxu0 %v78
    %1100 = vmatprep.subr.mxu0 0.0
    %1101 = vmatpush1.msra.mxu0 %v77
    %1102 = vmatprep.subr.mxu0 0.0
    %1103 = vmatpush1.msra.mxu0 %v76
    %1104 = vmatprep.subr.mxu0 0.0
    %1105 = vmatpush2.msra.mxu0 0.0
    %1106 = vmatprep.subr.mxu0 0.0
    %1107 = vmatpush2.msra.mxu0 0.0
    %1108 = vmatprep.subr.mxu0 0.0
    %1109 = vmatpush2.msra.mxu0 0.0
    %1110 = vmatprep.subr.mxu0 0.0
    %1111 = vmatpush2.msra.mxu0 0.0
    %1112 = vmatprep.subr.mxu0 0.0
    %1113 = vmatpush2.msra.mxu0 0.0
    %1114 = vmatprep.subr.mxu0 0.0
    %1115 = vmatpush2.msra.mxu0 0.0
    %1116 = vmatprep.subr.mxu0 0.0
    %1117 = vmatpush2.msra.mxu0 0.0
    %1118 = vmatprep.subr.mxu0 0.0
    %1119 = vmatpush2.msra.mxu0 0.0
    %1120 = vmatprep.subr.mxu0 0.0
    %1121 = vmatpush2.msra.mxu0 0.0
    %1122 = vmatprep.subr.mxu0 0.0
    %1123 = vmatpush2.msra.mxu0 0.0
    %1124 = vmatprep.subr.mxu0 0.0
    %1125 = vmatpush2.msra.mxu0 0.0
    %1126 = vmatprep.subr.mxu0 0.0
    %1127 = vmatpush2.msra.mxu0 0.0
    %1128 = vmatprep.subr.mxu0 0.0
    %1129 = vmatpush2.msra.mxu0 0.0
    %1130 = vmatprep.subr.mxu0 0.0
    %1131 = vmatpush2.msra.mxu0 0.0
    %1132 = vmatprep.subr.mxu0 0.0
    %1133 = vmatpush2.msra.mxu0 0.0
    %1134 = vmatprep.subr.mxu0 0.0
    %1135 = vmatpush2.msra.mxu0 0.0
    %1136 = vmatprep.mubr.f32.mxu0 0.0
    %1137 = vmatmul.mubr.f32.gmra.mxu0 %v1071
    %v1138 = vpop.f32.mrf.mxu0
    %v1139 = vadd.f32 %v275, %v1138
    %v1140 = vpop.f32.mrf.mxu0
    %1141 = vdwg.mxu0
    %v1142 = vmul.f32 %v990, 1.1126149
    %v1143 = vmul.f32 %v1139, 0.38052517
    %v1144 = vsub.f32 %v1142, %v1143
    %s1145 = scalar_lea.vmem %s1, 4
    %v1146 = vld [vmem:[%s1145] sm:$0x3]
    %v1147 = vmul.f32 %v1146, 0.3051433
    %v1148 = vadd.f32 %v1144, %v1147
    %v1149 = vsel %vm188, %v93, %v1148
    %v1150 = vld [vmem:[%s3 + $0x1] sm:$0x1]
    %v1151 = vlaneseq
    %v1152 = vshrl.u32 %v1151, 7
    %v1153 = vsub.s32 0, %v1152
    %v1154 = vrot.slane %v1150, %v1153
    %1155 = vmatprep.subr.mxu0 0.0
    %1156 = vmatpush1.msra.mxu0 %v75
    %1157 = vmatprep.subr.mxu0 0.0
    %1158 = vmatpush1.msra.mxu0 %v74
    %1159 = vmatprep.subr.mxu0 0.0
    %1160 = vmatpush1.msra.mxu0 %v73
    %1161 = vmatprep.subr.mxu0 0.0
    %1162 = vmatpush1.msra.mxu0 %v72
    %1163 = vmatprep.subr.mxu0 0.0
    %1164 = vmatpush1.msra.mxu0 %v71
    %1165 = vmatprep.subr.mxu0 0.0
    %1166 = vmatpush1.msra.mxu0 %v70
    %1167 = vmatprep.subr.mxu0 0.0
    %1168 = vmatpush1.msra.mxu0 %v69
    %1169 = vmatprep.subr.mxu0 0.0
    %1170 = vmatpush1.msra.mxu0 %v68
    %1171 = vmatprep.subr.mxu0 0.0
    %1172 = vmatpush1.msra.mxu0 %v67
    %1173 = vmatprep.subr.mxu0 0.0
    %1174 = vmatpush1.msra.mxu0 %v66
    %1175 = vmatprep.subr.mxu0 0.0
    %1176 = vmatpush1.msra.mxu0 %v65
    %1177 = vmatprep.subr.mxu0 0.0
    %1178 = vmatpush1.msra.mxu0 %v64
    %1179 = vmatprep.subr.mxu0 0.0
    %1180 = vmatpush1.msra.mxu0 %v63
    %1181 = vmatprep.subr.mxu0 0.0
    %1182 = vmatpush1.msra.mxu0 %v62
    %1183 = vmatprep.subr.mxu0 0.0
    %1184 = vmatpush1.msra.mxu0 %v61
    %1185 = vmatprep.subr.mxu0 0.0
    %1186 = vmatpush1.msra.mxu0 %v60
    %1187 = vmatprep.subr.mxu0 0.0
    %1188 = vmatpush2.msra.mxu0 0.0
    %1189 = vmatprep.subr.mxu0 0.0
    %1190 = vmatpush2.msra.mxu0 0.0
    %1191 = vmatprep.subr.mxu0 0.0
    %1192 = vmatpush2.msra.mxu0 0.0
    %1193 = vmatprep.subr.mxu0 0.0
    %1194 = vmatpush2.msra.mxu0 0.0
    %1195 = vmatprep.subr.mxu0 0.0
    %1196 = vmatpush2.msra.mxu0 0.0
    %1197 = vmatprep.subr.mxu0 0.0
    %1198 = vmatpush2.msra.mxu0 0.0
    %1199 = vmatprep.subr.mxu0 0.0
    %1200 = vmatpush2.msra.mxu0 0.0
    %1201 = vmatprep.subr.mxu0 0.0
    %1202 = vmatpush2.msra.mxu0 0.0
    %1203 = vmatprep.subr.mxu0 0.0
    %1204 = vmatpush2.msra.mxu0 0.0
    %1205 = vmatprep.subr.mxu0 0.0
    %1206 = vmatpush2.msra.mxu0 0.0
    %1207 = vmatprep.subr.mxu0 0.0
    %1208 = vmatpush2.msra.mxu0 0.0
    %1209 = vmatprep.subr.mxu0 0.0
    %1210 = vmatpush2.msra.mxu0 0.0
    %1211 = vmatprep.subr.mxu0 0.0
    %1212 = vmatpush2.msra.mxu0 0.0
    %1213 = vmatprep.subr.mxu0 0.0
    %1214 = vmatpush2.msra.mxu0 0.0
    %1215 = vmatprep.subr.mxu0 0.0
    %1216 = vmatpush2.msra.mxu0 0.0
    %1217 = vmatprep.subr.mxu0 0.0
    %1218 = vmatpush2.msra.mxu0 0.0
    %1219 = vmatprep.mubr.f32.mxu0 0.0
    %1220 = vmatmul.mubr.f32.gmra.mxu0 %v1149
    %v1221 = vpop.f32.mrf.mxu0
    %v1222 = vadd.f32 %v1154, %v1221
    %v1223 = vpop.f32.mrf.mxu0
    %1224 = vdwg.mxu0
    %v1225 = vmax.f32 %v1222, 0.0
    %v1226 = vadd.f32 %v1222, %v179
    %v1227 = vmax.f32 %v1226, 0.0
    %v1228 = vmul.f32 %v1225, -0.2
    %v1229 = vmul.f32 %v1227, 1.2
    %v1230 = vadd.f32 %v1228, %v1229
    %1231 = vmatprep.subr.mxu0 0.0
    %1232 = vmatpush1.msra.mxu0 %v91
    %1233 = vmatprep.subr.mxu0 0.0
    %1234 = vmatpush1.msra.mxu0 %v90
    %1235 = vmatprep.subr.mxu0 0.0
    %1236 = vmatpush1.msra.mxu0 %v89
    %1237 = vmatprep.subr.mxu0 0.0
    %1238 = vmatpush1.msra.mxu0 %v88
    %1239 = vmatprep.subr.mxu0 0.0
    %1240 = vmatpush1.msra.mxu0 %v87
    %1241 = vmatprep.subr.mxu0 0.0
    %1242 = vmatpush1.msra.mxu0 %v86
    %1243 = vmatprep.subr.mxu0 0.0
    %1244 = vmatpush1.msra.mxu0 %v85
    %1245 = vmatprep.subr.mxu0 0.0
    %1246 = vmatpush1.msra.mxu0 %v84
    %1247 = vmatprep.subr.mxu0 0.0
    %1248 = vmatpush1.msra.mxu0 %v83
    %1249 = vmatprep.subr.mxu0 0.0
    %1250 = vmatpush1.msra.mxu0 %v82
    %1251 = vmatprep.subr.mxu0 0.0
    %1252 = vmatpush1.msra.mxu0 %v81
    %1253 = vmatprep.subr.mxu0 0.0
    %1254 = vmatpush1.msra.mxu0 %v80
    %1255 = vmatprep.subr.mxu0 0.0
    %1256 = vmatpush1.msra.mxu0 %v79
    %1257 = vmatprep.subr.mxu0 0.0
    %1258 = vmatpush1.msra.mxu0 %v78
    %1259 = vmatprep.subr.mxu0 0.0
    %1260 = vmatpush1.msra.mxu0 %v77
    %1261 = vmatprep.subr.mxu0 0.0
    %1262 = vmatpush1.msra.mxu0 %v76
    %1263 = vmatprep.subr.mxu0 0.0
    %1264 = vmatpush2.msra.mxu0 0.0
    %1265 = vmatprep.subr.mxu0 0.0
    %1266 = vmatpush2.msra.mxu0 0.0
    %1267 = vmatprep.subr.mxu0 0.0
    %1268 = vmatpush2.msra.mxu0 0.0
    %1269 = vmatprep.subr.mxu0 0.0
    %1270 = vmatpush2.msra.mxu0 0.0
    %1271 = vmatprep.subr.mxu0 0.0
    %1272 = vmatpush2.msra.mxu0 0.0
    %1273 = vmatprep.subr.mxu0 0.0
    %1274 = vmatpush2.msra.mxu0 0.0
    %1275 = vmatprep.subr.mxu0 0.0
    %1276 = vmatpush2.msra.mxu0 0.0
    %1277 = vmatprep.subr.mxu0 0.0
    %1278 = vmatpush2.msra.mxu0 0.0
    %1279 = vmatprep.subr.mxu0 0.0
    %1280 = vmatpush2.msra.mxu0 0.0
    %1281 = vmatprep.subr.mxu0 0.0
    %1282 = vmatpush2.msra.mxu0 0.0
    %1283 = vmatprep.subr.mxu0 0.0
    %1284 = vmatpush2.msra.mxu0 0.0
    %1285 = vmatprep.subr.mxu0 0.0
    %1286 = vmatpush2.msra.mxu0 0.0
    %1287 = vmatprep.subr.mxu0 0.0
    %1288 = vmatpush2.msra.mxu0 0.0
    %1289 = vmatprep.subr.mxu0 0.0
    %1290 = vmatpush2.msra.mxu0 0.0
    %1291 = vmatprep.subr.mxu0 0.0
    %1292 = vmatpush2.msra.mxu0 0.0
    %1293 = vmatprep.subr.mxu0 0.0
    %1294 = vmatpush2.msra.mxu0 0.0
    %1295 = vmatprep.mubr.f32.mxu0 0.0
    %1296 = vmatmul.mubr.f32.gmra.mxu0 %v1230
    %v1297 = vpop.f32.mrf.mxu0
    %v1298 = vadd.f32 %v275, %v1297
    %v1299 = vpop.f32.mrf.mxu0
    %1300 = vdwg.mxu0
    %v1301 = vmul.f32 %v1149, 1.0633926
    %v1302 = vmul.f32 %v1298, 0.31448385
    %v1303 = vsub.f32 %v1301, %v1302
    %s1304 = scalar_lea.vmem %s1, 2
    %v1305 = vld [vmem:[%s1304] sm:$0x3]
    %v1306 = vmul.f32 %v1305, 0.17861615
    %v1307 = vadd.f32 %v1303, %v1306
    %v1308 = vsel %vm188, %v93, %v1307
    %v1309 = vld [vmem:[%s3] sm:$0x1]
    %v1310 = vlaneseq
    %v1311 = vshrl.u32 %v1310, 7
    %v1312 = vsub.s32 0, %v1311
    %v1313 = vrot.slane %v1309, %v1312
    %1314 = vmatprep.subr.mxu0 0.0
    %1315 = vmatpush1.msra.mxu0 %v75
    %1316 = vmatprep.subr.mxu0 0.0
    %1317 = vmatpush1.msra.mxu0 %v74
    %1318 = vmatprep.subr.mxu0 0.0
    %1319 = vmatpush1.msra.mxu0 %v73
    %1320 = vmatprep.subr.mxu0 0.0
    %1321 = vmatpush1.msra.mxu0 %v72
    %1322 = vmatprep.subr.mxu0 0.0
    %1323 = vmatpush1.msra.mxu0 %v71
    %1324 = vmatprep.subr.mxu0 0.0
    %1325 = vmatpush1.msra.mxu0 %v70
    %1326 = vmatprep.subr.mxu0 0.0
    %1327 = vmatpush1.msra.mxu0 %v69
    %1328 = vmatprep.subr.mxu0 0.0
    %1329 = vmatpush1.msra.mxu0 %v68
    %1330 = vmatprep.subr.mxu0 0.0
    %1331 = vmatpush1.msra.mxu0 %v67
    %1332 = vmatprep.subr.mxu0 0.0
    %1333 = vmatpush1.msra.mxu0 %v66
    %1334 = vmatprep.subr.mxu0 0.0
    %1335 = vmatpush1.msra.mxu0 %v65
    %1336 = vmatprep.subr.mxu0 0.0
    %1337 = vmatpush1.msra.mxu0 %v64
    %1338 = vmatprep.subr.mxu0 0.0
    %1339 = vmatpush1.msra.mxu0 %v63
    %1340 = vmatprep.subr.mxu0 0.0
    %1341 = vmatpush1.msra.mxu0 %v62
    %1342 = vmatprep.subr.mxu0 0.0
    %1343 = vmatpush1.msra.mxu0 %v61
    %1344 = vmatprep.subr.mxu0 0.0
    %1345 = vmatpush1.msra.mxu0 %v60
    %1346 = vmatprep.subr.mxu0 0.0
    %1347 = vmatpush2.msra.mxu0 0.0
    %1348 = vmatprep.subr.mxu0 0.0
    %1349 = vmatpush2.msra.mxu0 0.0
    %1350 = vmatprep.subr.mxu0 0.0
    %1351 = vmatpush2.msra.mxu0 0.0
    %1352 = vmatprep.subr.mxu0 0.0
    %1353 = vmatpush2.msra.mxu0 0.0
    %1354 = vmatprep.subr.mxu0 0.0
    %1355 = vmatpush2.msra.mxu0 0.0
    %1356 = vmatprep.subr.mxu0 0.0
    %1357 = vmatpush2.msra.mxu0 0.0
    %1358 = vmatprep.subr.mxu0 0.0
    %1359 = vmatpush2.msra.mxu0 0.0
    %1360 = vmatprep.subr.mxu0 0.0
    %1361 = vmatpush2.msra.mxu0 0.0
    %1362 = vmatprep.subr.mxu0 0.0
    %1363 = vmatpush2.msra.mxu0 0.0
    %1364 = vmatprep.subr.mxu0 0.0
    %1365 = vmatpush2.msra.mxu0 0.0
    %1366 = vmatprep.subr.mxu0 0.0
    %1367 = vmatpush2.msra.mxu0 0.0
    %1368 = vmatprep.subr.mxu0 0.0
    %1369 = vmatpush2.msra.mxu0 0.0
    %1370 = vmatprep.subr.mxu0 0.0
    %1371 = vmatpush2.msra.mxu0 0.0
    %1372 = vmatprep.subr.mxu0 0.0
    %1373 = vmatpush2.msra.mxu0 0.0
    %1374 = vmatprep.subr.mxu0 0.0
    %1375 = vmatpush2.msra.mxu0 0.0
    %1376 = vmatprep.subr.mxu0 0.0
    %1377 = vmatpush2.msra.mxu0 0.0
    %1378 = vmatprep.mubr.f32.mxu0 0.0
    %1379 = vmatmul.mubr.f32.gmra.mxu0 %v1308
    %v1380 = vpop.f32.mrf.mxu0
    %v1381 = vadd.f32 %v1313, %v1380
    %v1382 = vpop.f32.mrf.mxu0
    %1383 = vdwg.mxu0
    %v1384 = vmax.f32 %v1381, 0.0
    %v1385 = vadd.f32 %v1381, %v179
    %v1386 = vmax.f32 %v1385, 0.0
    %v1387 = vmul.f32 %v1384, -0.2
    %v1388 = vmul.f32 %v1386, 1.2
    %v1389 = vadd.f32 %v1387, %v1388
    %1390 = vmatprep.subr.mxu0 0.0
    %1391 = vmatpush1.msra.mxu0 %v91
    %1392 = vmatprep.subr.mxu0 0.0
    %1393 = vmatpush1.msra.mxu0 %v90
    %1394 = vmatprep.subr.mxu0 0.0
    %1395 = vmatpush1.msra.mxu0 %v89
    %1396 = vmatprep.subr.mxu0 0.0
    %1397 = vmatpush1.msra.mxu0 %v88
    %1398 = vmatprep.subr.mxu0 0.0
    %1399 = vmatpush1.msra.mxu0 %v87
    %1400 = vmatprep.subr.mxu0 0.0
    %1401 = vmatpush1.msra.mxu0 %v86
    %1402 = vmatprep.subr.mxu0 0.0
    %1403 = vmatpush1.msra.mxu0 %v85
    %1404 = vmatprep.subr.mxu0 0.0
    %1405 = vmatpush1.msra.mxu0 %v84
    %1406 = vmatprep.subr.mxu0 0.0
    %1407 = vmatpush1.msra.mxu0 %v83
    %1408 = vmatprep.subr.mxu0 0.0
    %1409 = vmatpush1.msra.mxu0 %v82
    %1410 = vmatprep.subr.mxu0 0.0
    %1411 = vmatpush1.msra.mxu0 %v81
    %1412 = vmatprep.subr.mxu0 0.0
    %1413 = vmatpush1.msra.mxu0 %v80
    %1414 = vmatprep.subr.mxu0 0.0
    %1415 = vmatpush1.msra.mxu0 %v79
    %1416 = vmatprep.subr.mxu0 0.0
    %1417 = vmatpush1.msra.mxu0 %v78
    %1418 = vmatprep.subr.mxu0 0.0
    %1419 = vmatpush1.msra.mxu0 %v77
    %1420 = vmatprep.subr.mxu0 0.0
    %1421 = vmatpush1.msra.mxu0 %v76
    %1422 = vmatprep.subr.mxu0 0.0
    %1423 = vmatpush2.msra.mxu0 0.0
    %1424 = vmatprep.subr.mxu0 0.0
    %1425 = vmatpush2.msra.mxu0 0.0
    %1426 = vmatprep.subr.mxu0 0.0
    %1427 = vmatpush2.msra.mxu0 0.0
    %1428 = vmatprep.subr.mxu0 0.0
    %1429 = vmatpush2.msra.mxu0 0.0
    %1430 = vmatprep.subr.mxu0 0.0
    %1431 = vmatpush2.msra.mxu0 0.0
    %1432 = vmatprep.subr.mxu0 0.0
    %1433 = vmatpush2.msra.mxu0 0.0
    %1434 = vmatprep.subr.mxu0 0.0
    %1435 = vmatpush2.msra.mxu0 0.0
    %1436 = vmatprep.subr.mxu0 0.0
    %1437 = vmatpush2.msra.mxu0 0.0
    %1438 = vmatprep.subr.mxu0 0.0
    %1439 = vmatpush2.msra.mxu0 0.0
    %1440 = vmatprep.subr.mxu0 0.0
    %1441 = vmatpush2.msra.mxu0 0.0
    %1442 = vmatprep.subr.mxu0 0.0
    %1443 = vmatpush2.msra.mxu0 0.0
    %1444 = vmatprep.subr.mxu0 0.0
    %1445 = vmatpush2.msra.mxu0 0.0
    %1446 = vmatprep.subr.mxu0 0.0
    %1447 = vmatpush2.msra.mxu0 0.0
    %1448 = vmatprep.subr.mxu0 0.0
    %1449 = vmatpush2.msra.mxu0 0.0
    %1450 = vmatprep.subr.mxu0 0.0
    %1451 = vmatpush2.msra.mxu0 0.0
    %1452 = vmatprep.subr.mxu0 0.0
    %1453 = vmatpush2.msra.mxu0 0.0
    %1454 = vmatprep.mubr.f32.mxu0 0.0
    %1455 = vmatmul.mubr.f32.gmra.mxu0 %v1389
    %v1456 = vpop.f32.mrf.mxu0
    %v1457 = vadd.f32 %v275, %v1456
    %v1458 = vpop.f32.mrf.mxu0
    %1459 = vdwg.mxu0
    %v1460 = vmul.f32 %v1308, 1.0217898
    %v1461 = vmul.f32 %v1457, 0.20989116
    %v1462 = vsub.f32 %v1460, %v1461
    %v1463 = vld [vmem:[%s1] sm:$0x3]
    %v1464 = vmul.f32 %v1463, 0.0
    %v1465 = vadd.f32 %v1462, %v1464
    %v1466 = vsel %vm188, %v93, %v1465
    %1467 = vst [vmem:[%s9] sm:$0x3] %v1466
    // Predicated region
    $region46: #{_sample_impl.1} parent=1 // pred_check
      _
    $region47: #{_sample_impl.1} parent=1 // pred_check_branch
      %1469 = sbr.rel (0) target = $region49
    $region48: #{_sample_impl.1} parent=1 // pred_region
      _
    $region49: #{_sample_impl.1} parent=1 // pred_fallthru
      _
    // Predicated region
    $region50: #{_sample_impl.1} parent=1 // pred_check
      _
    $region51: #{_sample_impl.1} parent=1 // pred_check_branch
      %1471 = sbr.rel (0) target = $region53
    $region52: #{_sample_impl.1} parent=1 // pred_region
      _
    $region53: #{_sample_impl.1} parent=1 // pred_fallthru
      _
    %1472 = vsyncpa [#allocation3], 1
    %1473 = vsyncpa [#allocation5], 1

</llo_original>
